<compile_context>
chip_gen: v5e
topology: v5e:2x2
jax: 0.10.0
libtpu: 0.0.40
codegen_flags: <defaults>
</compile_context>

<pallas_src>
import functools

import jax
import jax.numpy as jnp
from jax.experimental import pallas as pl
from jax.experimental.pallas import tpu as pltpu

DILATIONS = (1, 3, 5, 7)
_PAD = 8  # halo rows per side (max dilation is 7; 8 keeps the center 8-aligned)


# --------------------------------- kernel ----------------------------------

def _identity_block_kernel(x_ref, w1_ref, b1_ref, w2_ref, b2_ref,
                           wc_ref, ws_ref, bb_ref,
                           wfc1_ref, bfc1_ref, wfc2_ref, bfc2_ref,
                           o_ref, halo_ref, *, L, Bt, c_out):
    f32, bf16 = jnp.float32, jnp.bfloat16
    BtL = Bt * L
    P = _PAD

    # Zero the halo rows.  Done every step (cheap: 2*Bt*P*C bf16 stores) so the
    # scratch is valid on every TensorCore under megacore grid sharding.
    zeros_h = jnp.zeros((Bt, P, c_out), dtype=bf16)
    halo_ref[:, :P, :] = zeros_h
    halo_ref[:, P + L:, :] = zeros_h

    def tap(off):
        """Rows shifted by `off` within each batch element (zero outside [0, L))."""
        v = halo_ref[:, P + off: P + off + L, :]            # (Bt, L, C) bf16
        return v.reshape(BtL, c_out)

    x = x_ref[...]                                          # (BtL, Cin) bf16

    # conv1 (kernel_size=1); y1 stays bf16 for its whole lifetime.
    y1 = (jnp.dot(x, w1_ref[...], preferred_element_type=f32)
          + b1_ref[...]).astype(bf16)                       # (BtL, C)
    halo_ref[:, P:P + L, :] = y1.reshape(Bt, L, c_out)

    # conv2 (k=3, padding=1): im2col -> single K = 3C matmul, taps from halo.
    x3 = jnp.concatenate([tap(-1), y1, tap(1)], axis=-1)    # (BtL, 3C) bf16
    y2 = jnp.maximum(
        jnp.dot(x3, w2_ref[...], preferred_element_type=f32) + b2_ref[...], 0.0)
    y2b = y2.astype(bf16)
    halo_ref[:, P:P + L, :] = y2b.reshape(Bt, L, c_out)

    # Four dilated k=3 branches (== torch.cat([x11,x12,x13,x14], dim=1)), fused:
    #   * all center taps  -> one dense (C, C) matmul on y2 directly,
    #   * all 8 +/-d taps  -> ONE full-width (8C, C) block-diagonal matmul
    #     (tap order -1,+1,-3,+3,-5,+5,-7,+7).
    side_in = jnp.concatenate(
        [tap(s * d) for d in DILATIONS for s in (-1, 1)], axis=-1)  # (BtL, 8C)
    out = (jnp.dot(y2b, wc_ref[...], preferred_element_type=f32)
           + jnp.dot(side_in, ws_ref[...], preferred_element_type=f32)
           + bb_ref[...])                                   # (BtL, C) f32

    # SE gate: per-batch mean over length -> fc1 -> relu -> fc2 -> sigmoid.
    if Bt == 1:
        mean = jnp.mean(out, axis=0, keepdims=True)         # (1, C)
    else:
        mean = jnp.mean(out.reshape(Bt, L, c_out), axis=1)  # (Bt, C)
    h = jnp.maximum(
        jnp.dot(mean, wfc1_ref[...], preferred_element_type=f32) + bfc1_ref[...],
        0.0)
    logits = jnp.dot(h, wfc2_ref[...], preferred_element_type=f32) + bfc2_ref[...]
    gate = 1.0 / (1.0 + jnp.exp(-logits))                   # (Bt, C)
    if Bt == 1:
        gate_rows = gate                                    # broadcasts over rows
    else:
        gate_rows = jnp.broadcast_to(
            gate[:, None, :], (Bt, L, c_out)).reshape(BtL, c_out)

    # gate * out + residual(conv1 output), ReLU (f32 elementwise).
    res = jnp.maximum(gate_rows * out + y1.astype(f32), 0.0)

    # MaxPool1d(kernel_size=2, stride=2): lane-preserving sublane pairwise max.
    o_ref[...] = jnp.max(res.reshape(BtL // 2, 2, c_out), axis=1)


# --------------------------------- wrapper ---------------------------------

def _vmem_budget():
    """(vmem_limit_bytes, per-step live-bytes target), generation aware."""
    try:
        cap = int(pltpu.get_tpu_info().vmem_capacity_bytes)
    except Exception:                      # query unavailable (e.g. interpret)
        cap = 128 * 1024 * 1024
    if cap <= 64 * 1024 * 1024:            # v7x: 64 MiB VMEM per TensorCore
        return 40 * 1024 * 1024, 3 << 20
    return 64 * 1024 * 1024, 6 << 20       # v5e / v6e: 128 MiB


def _pick_block_batch(B, L, c_out, live_target):
    """Batch elements per grid step: B % Bt == 0, (8,128)-safe blocks, and
    >= 4 grid steps (>= 2 per v7x TensorCore) when B allows it."""
    def ok(bt):
        if bt < 1 or B % bt:
            return False
        if bt == B:
            return True
        return (bt * L) % 8 == 0 and (bt * (L // 2)) % 8 == 0

    per_batch = L * c_out * 48             # rough live slab bytes / batch element
    bt = max(1, min(B, live_target // max(per_batch, 1)))
    while bt > 1 and not ok(bt):
        bt -= 1
    if not ok(bt):
        return B                           # single full-batch step
    while bt > 1 and B // bt < 4:          # prefer >= 4 grid steps
        nbt = bt - 1
        while nbt > 1 and not ok(nbt):
            nbt -= 1
        if not ok(nbt):
            break
        bt = nbt
    return bt


def identity_block_forward(x_ncl, params):
    B, c_in, L = x_ncl.shape
    c_out = params['w1'].shape[0]
    assert L % 2 == 0, "MaxPool1d(kernel_size=2, stride=2) requires even L"
    assert c_out % 4 == 0

    f32, bf16 = jnp.float32, jnp.bfloat16
    vmem_limit, live_target = _vmem_budget()
    Bt = _pick_block_batch(B, L, c_out, live_target)
    assert B % Bt == 0
    assert Bt == B or ((Bt * L) % 8 == 0 and (Bt * (L // 2)) % 8 == 0)

    c4 = c_out // 4

    # --- matmul-friendly parameter layouts ---
    w1_k = params['w1'][:, :, 0].T.astype(bf16)                     # (Cin, C)
    b1_k = params['b1'][None, :].astype(f32)                        # (1, C)

    # conv2 (k=3): tap order [-1, 0, +1] == kernel index 0, 1, 2.
    w2_k = jnp.concatenate([params['w2'][:, :, k].T for k in range(3)],
                           axis=0).astype(bf16)                     # (3C, C)
    b2_k = params['b2'][None, :].astype(f32)                        # (1, C)

    # Dilated branches: center taps -> dense (C, C); the 8 side taps -> one
    # block-diagonal (8C, C) weight.  Branch i owns output columns
    # [i*C/4, (i+1)*C/4); row blocks follow tap order -1,+1,-3,+3,-5,+5,-7,+7.
    wc_k = jnp.concatenate([params[f'wb{i}'][:, :, 1].T for i in range(4)],
                           axis=1).astype(bf16)                     # (C, C)
    ws = jnp.zeros((8 * c_out, c_out), f32)
    for i in range(4):
        ws = ws.at[(2 * i) * c_out:(2 * i + 1) * c_out,
                   i * c4:(i + 1) * c4].set(params[f'wb{i}'][:, :, 0].T)
        ws = ws.at[(2 * i + 1) * c_out:(2 * i + 2) * c_out,
                   i * c4:(i + 1) * c4].set(params[f'wb{i}'][:, :, 2].T)
    ws_k = ws.astype(bf16)                                          # (8C, C)
    bb_k = jnp.concatenate(
        [params[f'bb{i}'] for i in range(4)])[None, :].astype(f32)  # (1, C)

    wfc1_k = params['wfc1'].T.astype(f32)                           # (C, Cse)
    bfc1_k = params['bfc1'][None, :].astype(f32)                    # (1, Cse)
    wfc2_k = params['wfc2'].T.astype(f32)                           # (Cse, C)
    bfc2_k = params['bfc2'][None, :].astype(f32)                    # (1, C)

    # NCL -> flattened (B*L, Cin), batch-major rows; cast to bf16 BEFORE the
    # wrapper-side relayout so it moves half the bytes.
    x_2d = jnp.transpose(x_ncl.astype(bf16), (0, 2, 1)).reshape(B * L, c_in)

    weights = (w1_k, b1_k, w2_k, b2_k, wc_k, ws_k, bb_k,
               wfc1_k, bfc1_k, wfc2_k, bfc2_k)

    kernel = functools.partial(_identity_block_kernel, L=L, Bt=Bt, c_out=c_out)

    def call(single_buffer_weights):
        def wspec(a):
            nd = a.ndim
            imap = lambda i, nd=nd: (0,) * nd
            if single_buffer_weights:
                return pl.BlockSpec(a.shape, imap, pipeline_mode=pl.Buffered(1))
            return pl.BlockSpec(a.shape, imap)

        return pl.pallas_call(
            kernel,
            out_shape=jax.ShapeDtypeStruct((B * (L // 2), c_out), f32),
            grid=(B // Bt,),
            in_specs=[pl.BlockSpec((Bt * L, c_in), lambda i: (i, 0))]
                     + [wspec(a) for a in weights],
            out_specs=pl.BlockSpec((Bt * (L // 2), c_out), lambda i: (i, 0)),
            scratch_shapes=[pltpu.VMEM((Bt, L + 2 * _PAD, c_out), bf16)],
            compiler_params=pltpu.CompilerParams(
                dimension_semantics=("parallel",),
                vmem_limit_bytes=vmem_limit,
            ),
        )(x_2d, *weights)

    try:
        out2d = call(True)     # weights/biases single-buffered (constant blocks)
    except Exception:
        out2d = call(False)    # fallback if pl.Buffered(1) is unsupported

    # TODO(synk): for very large L, add an L-tiling grid axis (two passes for
    # the SE global mean) instead of full-length intermediates; consumers that
    # accept the (B, L//2, C) layout can skip this final f32 transpose.
    return jnp.transpose(out2d.reshape(B, L // 2, c_out), (0, 2, 1))  # (B, C, L//2)


# ------------------------- deterministic parameters -------------------------

def init_params(key, c_in, c_out, ra):
    c4 = c_out // 4
    c_se = c_out // ra
    keys = jax.random.split(key, 16)

    def n(k, shape, scale=0.1):
        return scale * jax.random.normal(k, shape, jnp.float32)

    p = {
        'w1': n(keys[0], (c_out, c_in, 1)),  'b1': n(keys[1], (c_out,)),
        'w2': n(keys[2], (c_out, c_out, 3)), 'b2': n(keys[3], (c_out,)),
        'wfc1': n(keys[4], (c_se, c_out)),   'bfc1': n(keys[5], (c_se,)),
        'wfc2': n(keys[6], (c_out, c_se)),   'bfc2': n(keys[7], (c_out,)),
    }
    for i in range(4):
        p[f'wb{i}'] = n(keys[8 + 2 * i], (c4, c_out, 3))
        p[f'bb{i}'] = n(keys[9 + 2 * i], (c4,))
    return p


# ------------------------------ pure-JAX reference --------------------------

def _conv1d_ref(x, w, b, padding, dilation):
    out = jax.lax.conv_general_dilated(
        x, w, window_strides=(1,), padding=[(padding, padding)],
        rhs_dilation=(dilation,), dimension_numbers=('NCH', 'OIH', 'NCH'),
        precision=jax.lax.Precision.HIGHEST)
    return out + b[None, :, None]


def identity_block_reference(x, p):
    y1 = _conv1d_ref(x, p['w1'], p['b1'], 0, 1)
    y2 = jax.nn.relu(_conv1d_ref(y1, p['w2'], p['b2'], 1, 1))
    branches = [_conv1d_ref(y2, p[f'wb{i}'], p[f'bb{i}'], d, d)
                for i, d in enumerate(DILATIONS)]
    out = jnp.concatenate(branches, axis=1)
    mean = jnp.mean(out, axis=2)
    h = jax.nn.relu(jnp.dot(mean, p['wfc1'].T,
                            precision=jax.lax.Precision.HIGHEST) + p['bfc1'])
    gate = jax.nn.sigmoid(jnp.dot(h, p['wfc2'].T,
                                  precision=jax.lax.Precision.HIGHEST) + p['bfc2'])
    res = jax.nn.relu(gate[:, :, None] * out + y1)
    B, C, L = res.shape
    return jnp.max(res.reshape(B, C, L // 2, 2), axis=-1)


# ----------------------------------- main -----------------------------------

if __name__ == "__main__":
    B, C_IN, C_OUT, L, RA = 2, 4, 32, 16, 4
    key = jax.random.PRNGKey(0)
    kx, kp = jax.random.split(key)
    x = jax.random.normal(kx, (B, C_IN, L), jnp.float32)
    params = init_params(kp, C_IN, C_OUT, RA)

    out = jax.block_until_ready(identity_block_forward(x, params))
    ref = jax.block_until_ready(identity_block_reference(x, params))

    assert out.shape == (B, C_OUT, L // 2), out.shape
    # Kernel runs conv matmuls with bf16 operands (f32 accumulation) and keeps
    # y1 in bf16; compare against the all-f32 reference with relaxed tolerance.
    assert jnp.allclose(out, ref, rtol=2e-2, atol=2e-2), \
        float(jnp.max(jnp.abs(out - ref)))
    print("KERNEL_OK")
</pallas_src>

<mosaic_0001>
module attributes {stable_mosaic.version = 11 : i64} {
  func.func @_identity_block_kernel(%arg0: i32, %arg1: memref<16x4xbf16, #tpu.memory_space<vmem>>, %arg2: memref<4x32xbf16, #tpu.memory_space<vmem>>, %arg3: memref<1x32xf32, #tpu.memory_space<vmem>>, %arg4: memref<96x32xbf16, #tpu.memory_space<vmem>>, %arg5: memref<1x32xf32, #tpu.memory_space<vmem>>, %arg6: memref<32x32xbf16, #tpu.memory_space<vmem>>, %arg7: memref<256x32xbf16, #tpu.memory_space<vmem>>, %arg8: memref<1x32xf32, #tpu.memory_space<vmem>>, %arg9: memref<32x8xf32, #tpu.memory_space<vmem>>, %arg10: memref<1x8xf32, #tpu.memory_space<vmem>>, %arg11: memref<8x32xf32, #tpu.memory_space<vmem>>, %arg12: memref<1x32xf32, #tpu.memory_space<vmem>>, %arg13: memref<8x32xf32, #tpu.memory_space<vmem>>, %arg14: memref<1x32x32xbf16, #tpu.memory_space<vmem>>) attributes {dimension_semantics = [#tpu.dimension_semantics<parallel>], iteration_bounds = array<i64: 2>, scalar_prefetch = 0 : i64, scratch_operands = 1 : i64, tpu.core_type = #tpu.core_type<tc>, window_params = [{transform_indices = @transform_0, window_bounds = array<i64: 16, 4>}, {pipeline_mode = #tpu.pipeline_mode<synchronous>, transform_indices = @transform_1, window_bounds = array<i64: 4, 32>}, {pipeline_mode = #tpu.pipeline_mode<synchronous>, transform_indices = @transform_2, window_bounds = array<i64: 1, 32>}, {pipeline_mode = #tpu.pipeline_mode<synchronous>, transform_indices = @transform_3, window_bounds = array<i64: 96, 32>}, {pipeline_mode = #tpu.pipeline_mode<synchronous>, transform_indices = @transform_4, window_bounds = array<i64: 1, 32>}, {pipeline_mode = #tpu.pipeline_mode<synchronous>, transform_indices = @transform_5, window_bounds = array<i64: 32, 32>}, {pipeline_mode = #tpu.pipeline_mode<synchronous>, transform_indices = @transform_6, window_bounds = array<i64: 256, 32>}, {pipeline_mode = #tpu.pipeline_mode<synchronous>, transform_indices = @transform_7, window_bounds = array<i64: 1, 32>}, {pipeline_mode = #tpu.pipeline_mode<synchronous>, transform_indices = @transform_8, window_bounds = array<i64: 32, 8>}, {pipeline_mode = #tpu.pipeline_mode<synchronous>, transform_indices = @transform_9, window_bounds = array<i64: 1, 8>}, {pipeline_mode = #tpu.pipeline_mode<synchronous>, transform_indices = @transform_10, window_bounds = array<i64: 8, 32>}, {pipeline_mode = #tpu.pipeline_mode<synchronous>, transform_indices = @transform_11, window_bounds = array<i64: 1, 32>}, {transform_indices = @transform_12, window_bounds = array<i64: 8, 32>}]} {
    %cst = arith.constant 0.000000e+00 : bf16
    %0 = vector.broadcast %cst : bf16 to vector<1x8x32xbf16>
    %c0 = arith.constant 0 : index
    %c0_0 = arith.constant 0 : index
    %c0_1 = arith.constant 0 : index
    %1 = vector.load %arg14[%c0, %c0_0, %c0_1] : memref<1x32x32xbf16, #tpu.memory_space<vmem>>, vector<1x8x32xbf16>
    tpu.vector_store %arg14[%c0, %c0_0, %c0_1], %0 {strides = array<i32>} : memref<1x32x32xbf16, #tpu.memory_space<vmem>>, vector<1x8x32xbf16>,
    %c0_2 = arith.constant 0 : index
    %c24 = arith.constant 24 : index
    %c0_3 = arith.constant 0 : index
    %2 = vector.load %arg14[%c0_2, %c24, %c0_3] : memref<1x32x32xbf16, #tpu.memory_space<vmem>>, vector<1x8x32xbf16>
    tpu.vector_store %arg14[%c0_2, %c24, %c0_3], %0 {strides = array<i32>} : memref<1x32x32xbf16, #tpu.memory_space<vmem>>, vector<1x8x32xbf16>,
    %c0_4 = arith.constant 0 : index
    %c0_5 = arith.constant 0 : index
    %3 = vector.load %arg1[%c0_4, %c0_5] : memref<16x4xbf16, #tpu.memory_space<vmem>>, vector<16x4xbf16>
    %c0_6 = arith.constant 0 : index
    %c0_7 = arith.constant 0 : index
    %4 = vector.load %arg2[%c0_6, %c0_7] : memref<4x32xbf16, #tpu.memory_space<vmem>>, vector<4x32xbf16>
    %cst_8 = arith.constant dense<0.000000e+00> : vector<16x32xf32>
    %5 = tpu.matmul %3, %4, %cst_8 {dimension_numbers = #tpu.dot_dimension_numbers<[1], [0], [0], [1], [0, 0, 1, 1], [], []>} : vector<16x4xbf16>, vector<4x32xbf16>, vector<16x32xf32> -> vector<16x32xf32>
    %c0_9 = arith.constant 0 : index
    %c0_10 = arith.constant 0 : index
    %6 = vector.load %arg3[%c0_9, %c0_10] : memref<1x32xf32, #tpu.memory_space<vmem>>, vector<1x32xf32>
    %7 = vector.broadcast %6 : vector<1x32xf32> to vector<16x32xf32>
    %8 = arith.addf %5, %7 : vector<16x32xf32>
    %9 = arith.truncf %8 : vector<16x32xf32> to vector<16x32xbf16>
    %10 = vector.shape_cast %9 : vector<16x32xbf16> to vector<1x16x32xbf16>
    %c0_11 = arith.constant 0 : index
    %c8 = arith.constant 8 : index
    %c0_12 = arith.constant 0 : index
    %11 = vector.load %arg14[%c0_11, %c8, %c0_12] : memref<1x32x32xbf16, #tpu.memory_space<vmem>>, vector<1x16x32xbf16>
    tpu.vector_store %arg14[%c0_11, %c8, %c0_12], %10 {strides = array<i32>} : memref<1x32x32xbf16, #tpu.memory_space<vmem>>, vector<1x16x32xbf16>,
    %c0_13 = arith.constant 0 : index
    %c7 = arith.constant 7 : index
    %c0_14 = arith.constant 0 : index
    %12 = vector.load %arg14[%c0_13, %c7, %c0_14] : memref<1x32x32xbf16, #tpu.memory_space<vmem>>, vector<1x16x32xbf16>
    %13 = vector.shape_cast %12 : vector<1x16x32xbf16> to vector<16x32xbf16>
    %c0_15 = arith.constant 0 : index
    %c9 = arith.constant 9 : index
    %c0_16 = arith.constant 0 : index
    %14 = vector.load %arg14[%c0_15, %c9, %c0_16] : memref<1x32x32xbf16, #tpu.memory_space<vmem>>, vector<1x16x32xbf16>
    %15 = vector.shape_cast %14 : vector<1x16x32xbf16> to vector<16x32xbf16>
    %16 = tpu.concatenate %13, %9, %15 in 1 : vector<16x32xbf16>, vector<16x32xbf16>, vector<16x32xbf16> -> vector<16x96xbf16>
    %c0_17 = arith.constant 0 : index
    %c0_18 = arith.constant 0 : index
    %17 = vector.load %arg4[%c0_17, %c0_18] : memref<96x32xbf16, #tpu.memory_space<vmem>>, vector<96x32xbf16>
    %cst_19 = arith.constant dense<0.000000e+00> : vector<16x32xf32>
    %18 = tpu.matmul %16, %17, %cst_19 {dimension_numbers = #tpu.dot_dimension_numbers<[1], [0], [0], [1], [0, 0, 1, 1], [], []>} : vector<16x96xbf16>, vector<96x32xbf16>, vector<16x32xf32> -> vector<16x32xf32>
    %c0_20 = arith.constant 0 : index
    %c0_21 = arith.constant 0 : index
    %19 = vector.load %arg5[%c0_20, %c0_21] : memref<1x32xf32, #tpu.memory_space<vmem>>, vector<1x32xf32>
    %20 = vector.broadcast %19 : vector<1x32xf32> to vector<16x32xf32>
    %21 = arith.addf %18, %20 : vector<16x32xf32>
    %cst_22 = arith.constant 0.000000e+00 : f32
    %22 = vector.broadcast %cst_22 : f32 to vector<16x32xf32>
    %23 = arith.maximumf %21, %22 : vector<16x32xf32>
    %24 = arith.truncf %23 : vector<16x32xf32> to vector<16x32xbf16>
    %25 = vector.shape_cast %24 : vector<16x32xbf16> to vector<1x16x32xbf16>
    %c0_23 = arith.constant 0 : index
    %c8_24 = arith.constant 8 : index
    %c0_25 = arith.constant 0 : index
    %26 = vector.load %arg14[%c0_23, %c8_24, %c0_25] : memref<1x32x32xbf16, #tpu.memory_space<vmem>>, vector<1x16x32xbf16>
    tpu.vector_store %arg14[%c0_23, %c8_24, %c0_25], %25 {strides = array<i32>} : memref<1x32x32xbf16, #tpu.memory_space<vmem>>, vector<1x16x32xbf16>,
    %c0_26 = arith.constant 0 : index
    %c7_27 = arith.constant 7 : index
    %c0_28 = arith.constant 0 : index
    %27 = vector.load %arg14[%c0_26, %c7_27, %c0_28] : memref<1x32x32xbf16, #tpu.memory_space<vmem>>, vector<1x16x32xbf16>
    %28 = vector.shape_cast %27 : vector<1x16x32xbf16> to vector<16x32xbf16>
    %c0_29 = arith.constant 0 : index
    %c9_30 = arith.constant 9 : index
    %c0_31 = arith.constant 0 : index
    %29 = vector.load %arg14[%c0_29, %c9_30, %c0_31] : memref<1x32x32xbf16, #tpu.memory_space<vmem>>, vector<1x16x32xbf16>
    %30 = vector.shape_cast %29 : vector<1x16x32xbf16> to vector<16x32xbf16>
    %c0_32 = arith.constant 0 : index
    %c5 = arith.constant 5 : index
    %c0_33 = arith.constant 0 : index
    %31 = vector.load %arg14[%c0_32, %c5, %c0_33] : memref<1x32x32xbf16, #tpu.memory_space<vmem>>, vector<1x16x32xbf16>
    %32 = vector.shape_cast %31 : vector<1x16x32xbf16> to vector<16x32xbf16>
    %c0_34 = arith.constant 0 : index
    %c11 = arith.constant 11 : index
    %c0_35 = arith.constant 0 : index
    %33 = vector.load %arg14[%c0_34, %c11, %c0_35] : memref<1x32x32xbf16, #tpu.memory_space<vmem>>, vector<1x16x32xbf16>
    %34 = vector.shape_cast %33 : vector<1x16x32xbf16> to vector<16x32xbf16>
    %c0_36 = arith.constant 0 : index
    %c3 = arith.constant 3 : index
    %c0_37 = arith.constant 0 : index
    %35 = vector.load %arg14[%c0_36, %c3, %c0_37] : memref<1x32x32xbf16, #tpu.memory_space<vmem>>, vector<1x16x32xbf16>
    %36 = vector.shape_cast %35 : vector<1x16x32xbf16> to vector<16x32xbf16>
    %c0_38 = arith.constant 0 : index
    %c13 = arith.constant 13 : index
    %c0_39 = arith.constant 0 : index
    %37 = vector.load %arg14[%c0_38, %c13, %c0_39] : memref<1x32x32xbf16, #tpu.memory_space<vmem>>, vector<1x16x32xbf16>
    %38 = vector.shape_cast %37 : vector<1x16x32xbf16> to vector<16x32xbf16>
    %c0_40 = arith.constant 0 : index
    %c1 = arith.constant 1 : index
    %c0_41 = arith.constant 0 : index
    %39 = vector.load %arg14[%c0_40, %c1, %c0_41] : memref<1x32x32xbf16, #tpu.memory_space<vmem>>, vector<1x16x32xbf16>
    %40 = vector.shape_cast %39 : vector<1x16x32xbf16> to vector<16x32xbf16>
    %c0_42 = arith.constant 0 : index
    %c15 = arith.constant 15 : index
    %c0_43 = arith.constant 0 : index
    %41 = vector.load %arg14[%c0_42, %c15, %c0_43] : memref<1x32x32xbf16, #tpu.memory_space<vmem>>, vector<1x16x32xbf16>
    %42 = vector.shape_cast %41 : vector<1x16x32xbf16> to vector<16x32xbf16>
    %43 = tpu.concatenate %28, %30, %32, %34, %36, %38, %40, %42 in 1 : vector<16x32xbf16>, vector<16x32xbf16>, vector<16x32xbf16>, vector<16x32xbf16>, vector<16x32xbf16>, vector<16x32xbf16>, vector<16x32xbf16>, vector<16x32xbf16> -> vector<16x256xbf16>
    %c0_44 = arith.constant 0 : index
    %c0_45 = arith.constant 0 : index
    %44 = vector.load %arg6[%c0_44, %c0_45] : memref<32x32xbf16, #tpu.memory_space<vmem>>, vector<32x32xbf16>
    %cst_46 = arith.constant dense<0.000000e+00> : vector<16x32xf32>
    %45 = tpu.matmul %24, %44, %cst_46 {dimension_numbers = #tpu.dot_dimension_numbers<[1], [0], [0], [1], [0, 0, 1, 1], [], []>} : vector<16x32xbf16>, vector<32x32xbf16>, vector<16x32xf32> -> vector<16x32xf32>
    %c0_47 = arith.constant 0 : index
    %c0_48 = arith.constant 0 : index
    %46 = vector.load %arg7[%c0_47, %c0_48] : memref<256x32xbf16, #tpu.memory_space<vmem>>, vector<256x32xbf16>
    %cst_49 = arith.constant dense<0.000000e+00> : vector<16x32xf32>
    %47 = tpu.matmul %43, %46, %cst_49 {dimension_numbers = #tpu.dot_dimension_numbers<[1], [0], [0], [1], [0, 0, 1, 1], [], []>} : vector<16x256xbf16>, vector<256x32xbf16>, vector<16x32xf32> -> vector<16x32xf32>
    %48 = arith.addf %45, %47 : vector<16x32xf32>
    %c0_50 = arith.constant 0 : index
    %c0_51 = arith.constant 0 : index
    %49 = vector.load %arg8[%c0_50, %c0_51] : memref<1x32xf32, #tpu.memory_space<vmem>>, vector<1x32xf32>
    %50 = vector.broadcast %49 : vector<1x32xf32> to vector<16x32xf32>
    %51 = arith.addf %48, %50 : vector<16x32xf32>
    %cst_52 = arith.constant dense<0.000000e+00> : vector<32xf32>
    %52 = vector.multi_reduction <add>, %51, %cst_52 [0] : vector<16x32xf32> to vector<32xf32>
    %53 = vector.shape_cast %52 : vector<32xf32> to vector<1x32xf32>
    %cst_53 = arith.constant 1.600000e+01 : f32
    %54 = vector.broadcast %cst_53 : f32 to vector<1x32xf32>
    %55 = arith.divf %53, %54 : vector<1x32xf32>
    %c0_54 = arith.constant 0 : index
    %c0_55 = arith.constant 0 : index
    %56 = vector.load %arg9[%c0_54, %c0_55] : memref<32x8xf32, #tpu.memory_space<vmem>>, vector<32x8xf32>
    %cst_56 = arith.constant dense<0.000000e+00> : vector<1x8xf32>
    %57 = tpu.matmul %55, %56, %cst_56 {dimension_numbers = #tpu.dot_dimension_numbers<[1], [0], [0], [1], [0, 0, 1, 1], [], []>} : vector<1x32xf32>, vector<32x8xf32>, vector<1x8xf32> -> vector<1x8xf32>
    %c0_57 = arith.constant 0 : index
    %c0_58 = arith.constant 0 : index
    %58 = vector.load %arg10[%c0_57, %c0_58] : memref<1x8xf32, #tpu.memory_space<vmem>>, vector<1x8xf32>
    %59 = arith.addf %57, %58 : vector<1x8xf32>
    %cst_59 = arith.constant 0.000000e+00 : f32
    %60 = vector.broadcast %cst_59 : f32 to vector<1x8xf32>
    %61 = arith.maximumf %59, %60 : vector<1x8xf32>
    %c0_60 = arith.constant 0 : index
    %c0_61 = arith.constant 0 : index
    %62 = vector.load %arg11[%c0_60, %c0_61] : memref<8x32xf32, #tpu.memory_space<vmem>>, vector<8x32xf32>
    %cst_62 = arith.constant dense<0.000000e+00> : vector<1x32xf32>
    %63 = tpu.matmul %61, %62, %cst_62 {dimension_numbers = #tpu.dot_dimension_numbers<[1], [0], [0], [1], [0, 0, 1, 1], [], []>} : vector<1x8xf32>, vector<8x32xf32>, vector<1x32xf32> -> vector<1x32xf32>
    %c0_63 = arith.constant 0 : index
    %c0_64 = arith.constant 0 : index
    %64 = vector.load %arg12[%c0_63, %c0_64] : memref<1x32xf32, #tpu.memory_space<vmem>>, vector<1x32xf32>
    %65 = arith.addf %63, %64 : vector<1x32xf32>
    %cst_65 = arith.constant 0.000000e+00 : f32
    %66 = vector.broadcast %cst_65 : f32 to vector<1x32xf32>
    %67 = arith.subf %66, %65 : vector<1x32xf32>
    %68 = math.exp %67 : vector<1x32xf32>
    %cst_66 = arith.constant 1.000000e+00 : f32
    %69 = vector.broadcast %cst_66 : f32 to vector<1x32xf32>
    %70 = arith.addf %69, %68 : vector<1x32xf32>
    %cst_67 = arith.constant 1.000000e+00 : f32
    %71 = vector.broadcast %cst_67 : f32 to vector<1x32xf32>
    %72 = arith.divf %71, %70 : vector<1x32xf32>
    %73 = vector.broadcast %72 : vector<1x32xf32> to vector<16x32xf32>
    %74 = arith.mulf %73, %51 : vector<16x32xf32>
    %75 = arith.extf %9 : vector<16x32xbf16> to vector<16x32xf32>
    %76 = arith.addf %74, %75 : vector<16x32xf32>
    %cst_68 = arith.constant 0.000000e+00 : f32
    %77 = vector.broadcast %cst_68 : f32 to vector<16x32xf32>
    %78 = arith.maximumf %76, %77 : vector<16x32xf32>
    %79 = vector.shape_cast %78 : vector<16x32xf32> to vector<8x2x32xf32>
    %cst_69 = arith.constant dense<0xFF800000> : vector<8x32xf32>
    %80 = vector.multi_reduction <maximumf>, %79, %cst_69 [1] : vector<8x2x32xf32> to vector<8x32xf32>
    %c0_70 = arith.constant 0 : index
    %c0_71 = arith.constant 0 : index
    %81 = vector.load %arg13[%c0_70, %c0_71] : memref<8x32xf32, #tpu.memory_space<vmem>>, vector<8x32xf32>
    tpu.vector_store %arg13[%c0_70, %c0_71], %80 {strides = array<i32>} : memref<8x32xf32, #tpu.memory_space<vmem>>, vector<8x32xf32>,
    return
  }
  func.func @transform_0(%arg0: i32) -> (i32, i32) {
    %c0_i32 = arith.constant 0 : i32
    %c0_i32_0 = arith.constant 0 : i32
    return %arg0, %c0_i32 : i32, i32
  }
  func.func @transform_1(%arg0: i32) -> (i32, i32) {
    %c0_i32 = arith.constant 0 : i32
    %c0_i32_0 = arith.constant 0 : i32
    %c0_i32_1 = arith.constant 0 : i32
    return %c0_i32, %c0_i32_0 : i32, i32
  }
  func.func @transform_2(%arg0: i32) -> (i32, i32) {
    %c0_i32 = arith.constant 0 : i32
    %c0_i32_0 = arith.constant 0 : i32
    %c0_i32_1 = arith.constant 0 : i32
    return %c0_i32, %c0_i32_0 : i32, i32
  }
  func.func @transform_3(%arg0: i32) -> (i32, i32) {
    %c0_i32 = arith.constant 0 : i32
    %c0_i32_0 = arith.constant 0 : i32
    %c0_i32_1 = arith.constant 0 : i32
    return %c0_i32, %c0_i32_0 : i32, i32
  }
  func.func @transform_4(%arg0: i32) -> (i32, i32) {
    %c0_i32 = arith.constant 0 : i32
    %c0_i32_0 = arith.constant 0 : i32
    %c0_i32_1 = arith.constant 0 : i32
    return %c0_i32, %c0_i32_0 : i32, i32
  }
  func.func @transform_5(%arg0: i32) -> (i32, i32) {
    %c0_i32 = arith.constant 0 : i32
    %c0_i32_0 = arith.constant 0 : i32
    %c0_i32_1 = arith.constant 0 : i32
    return %c0_i32, %c0_i32_0 : i32, i32
  }
  func.func @transform_6(%arg0: i32) -> (i32, i32) {
    %c0_i32 = arith.constant 0 : i32
    %c0_i32_0 = arith.constant 0 : i32
    %c0_i32_1 = arith.constant 0 : i32
    return %c0_i32, %c0_i32_0 : i32, i32
  }
  func.func @transform_7(%arg0: i32) -> (i32, i32) {
    %c0_i32 = arith.constant 0 : i32
    %c0_i32_0 = arith.constant 0 : i32
    %c0_i32_1 = arith.constant 0 : i32
    return %c0_i32, %c0_i32_0 : i32, i32
  }
  func.func @transform_8(%arg0: i32) -> (i32, i32) {
    %c0_i32 = arith.constant 0 : i32
    %c0_i32_0 = arith.constant 0 : i32
    %c0_i32_1 = arith.constant 0 : i32
    return %c0_i32, %c0_i32_0 : i32, i32
  }
  func.func @transform_9(%arg0: i32) -> (i32, i32) {
    %c0_i32 = arith.constant 0 : i32
    %c0_i32_0 = arith.constant 0 : i32
    %c0_i32_1 = arith.constant 0 : i32
    return %c0_i32, %c0_i32_0 : i32, i32
  }
  func.func @transform_10(%arg0: i32) -> (i32, i32) {
    %c0_i32 = arith.constant 0 : i32
    %c0_i32_0 = arith.constant 0 : i32
    %c0_i32_1 = arith.constant 0 : i32
    return %c0_i32, %c0_i32_0 : i32, i32
  }
  func.func @transform_11(%arg0: i32) -> (i32, i32) {
    %c0_i32 = arith.constant 0 : i32
    %c0_i32_0 = arith.constant 0 : i32
    %c0_i32_1 = arith.constant 0 : i32
    return %c0_i32, %c0_i32_0 : i32, i32
  }
  func.func @transform_12(%arg0: i32) -> (i32, i32) {
    %c0_i32 = arith.constant 0 : i32
    %c0_i32_0 = arith.constant 0 : i32
    return %arg0, %c0_i32 : i32, i32
  }
}

module attributes {stable_mosaic.version = 11 : i64} {
  func.func @_identity_block_kernel(%arg0: i32, %arg1: memref<16x4xbf16, #tpu.memory_space<vmem>>, %arg2: memref<4x32xbf16, #tpu.memory_space<vmem>>, %arg3: memref<1x32xf32, #tpu.memory_space<vmem>>, %arg4: memref<96x32xbf16, #tpu.memory_space<vmem>>, %arg5: memref<1x32xf32, #tpu.memory_space<vmem>>, %arg6: memref<32x32xbf16, #tpu.memory_space<vmem>>, %arg7: memref<256x32xbf16, #tpu.memory_space<vmem>>, %arg8: memref<1x32xf32, #tpu.memory_space<vmem>>, %arg9: memref<32x8xf32, #tpu.memory_space<vmem>>, %arg10: memref<1x8xf32, #tpu.memory_space<vmem>>, %arg11: memref<8x32xf32, #tpu.memory_space<vmem>>, %arg12: memref<1x32xf32, #tpu.memory_space<vmem>>, %arg13: memref<8x32xf32, #tpu.memory_space<vmem>>, %arg14: memref<1x32x32xbf16, #tpu.memory_space<vmem>>) attributes {dimension_semantics = [#tpu.dimension_semantics<parallel>], iteration_bounds = array<i64: 2>, scalar_prefetch = 0 : i64, scratch_operands = 1 : i64, tpu.core_type = #tpu.core_type<tc>, window_params = [{transform_indices = @transform_0, window_bounds = array<i64: 16, 4>}, {pipeline_mode = #tpu.pipeline_mode<synchronous>, transform_indices = @transform_1, window_bounds = array<i64: 4, 32>}, {pipeline_mode = #tpu.pipeline_mode<synchronous>, transform_indices = @transform_2, window_bounds = array<i64: 1, 32>}, {pipeline_mode = #tpu.pipeline_mode<synchronous>, transform_indices = @transform_3, window_bounds = array<i64: 96, 32>}, {pipeline_mode = #tpu.pipeline_mode<synchronous>, transform_indices = @transform_4, window_bounds = array<i64: 1, 32>}, {pipeline_mode = #tpu.pipeline_mode<synchronous>, transform_indices = @transform_5, window_bounds = array<i64: 32, 32>}, {pipeline_mode = #tpu.pipeline_mode<synchronous>, transform_indices = @transform_6, window_bounds = array<i64: 256, 32>}, {pipeline_mode = #tpu.pipeline_mode<synchronous>, transform_indices = @transform_7, window_bounds = array<i64: 1, 32>}, {pipeline_mode = #tpu.pipeline_mode<synchronous>, transform_indices = @transform_8, window_bounds = array<i64: 32, 8>}, {pipeline_mode = #tpu.pipeline_mode<synchronous>, transform_indices = @transform_9, window_bounds = array<i64: 1, 8>}, {pipeline_mode = #tpu.pipeline_mode<synchronous>, transform_indices = @transform_10, window_bounds = array<i64: 8, 32>}, {pipeline_mode = #tpu.pipeline_mode<synchronous>, transform_indices = @transform_11, window_bounds = array<i64: 1, 32>}, {transform_indices = @transform_12, window_bounds = array<i64: 8, 32>}]} {
    %cst = arith.constant 0.000000e+00 : bf16
    %0 = vector.broadcast %cst : bf16 to vector<1x8x32xbf16>
    %c0 = arith.constant 0 : index
    %c0_0 = arith.constant 0 : index
    %c0_1 = arith.constant 0 : index
    %1 = vector.load %arg14[%c0, %c0_0, %c0_1] : memref<1x32x32xbf16, #tpu.memory_space<vmem>>, vector<1x8x32xbf16>
    tpu.vector_store %arg14[%c0, %c0_0, %c0_1], %0 {strides = array<i32>} : memref<1x32x32xbf16, #tpu.memory_space<vmem>>, vector<1x8x32xbf16>,
    %c0_2 = arith.constant 0 : index
    %c24 = arith.constant 24 : index
    %c0_3 = arith.constant 0 : index
    %2 = vector.load %arg14[%c0_2, %c24, %c0_3] : memref<1x32x32xbf16, #tpu.memory_space<vmem>>, vector<1x8x32xbf16>
    tpu.vector_store %arg14[%c0_2, %c24, %c0_3], %0 {strides = array<i32>} : memref<1x32x32xbf16, #tpu.memory_space<vmem>>, vector<1x8x32xbf16>,
    %c0_4 = arith.constant 0 : index
    %c0_5 = arith.constant 0 : index
    %3 = vector.load %arg1[%c0_4, %c0_5] : memref<16x4xbf16, #tpu.memory_space<vmem>>, vector<16x4xbf16>
    %c0_6 = arith.constant 0 : index
    %c0_7 = arith.constant 0 : index
    %4 = vector.load %arg2[%c0_6, %c0_7] : memref<4x32xbf16, #tpu.memory_space<vmem>>, vector<4x32xbf16>
    %cst_8 = arith.constant dense<0.000000e+00> : vector<16x32xf32>
    %5 = tpu.matmul %3, %4, %cst_8 {dimension_numbers = #tpu.dot_dimension_numbers<[1], [0], [0], [1], [0, 0, 1, 1], [], []>} : vector<16x4xbf16>, vector<4x32xbf16>, vector<16x32xf32> -> vector<16x32xf32>
    %c0_9 = arith.constant 0 : index
    %c0_10 = arith.constant 0 : index
    %6 = vector.load %arg3[%c0_9, %c0_10] : memref<1x32xf32, #tpu.memory_space<vmem>>, vector<1x32xf32>
    %7 = vector.broadcast %6 : vector<1x32xf32> to vector<16x32xf32>
    %8 = arith.addf %5, %7 : vector<16x32xf32>
    %9 = arith.truncf %8 : vector<16x32xf32> to vector<16x32xbf16>
    %10 = vector.shape_cast %9 : vector<16x32xbf16> to vector<1x16x32xbf16>
    %c0_11 = arith.constant 0 : index
    %c8 = arith.constant 8 : index
    %c0_12 = arith.constant 0 : index
    %11 = vector.load %arg14[%c0_11, %c8, %c0_12] : memref<1x32x32xbf16, #tpu.memory_space<vmem>>, vector<1x16x32xbf16>
    tpu.vector_store %arg14[%c0_11, %c8, %c0_12], %10 {strides = array<i32>} : memref<1x32x32xbf16, #tpu.memory_space<vmem>>, vector<1x16x32xbf16>,
    %c0_13 = arith.constant 0 : index
    %c7 = arith.constant 7 : index
    %c0_14 = arith.constant 0 : index
    %12 = vector.load %arg14[%c0_13, %c7, %c0_14] : memref<1x32x32xbf16, #tpu.memory_space<vmem>>, vector<1x16x32xbf16>
    %13 = vector.shape_cast %12 : vector<1x16x32xbf16> to vector<16x32xbf16>
    %c0_15 = arith.constant 0 : index
    %c9 = arith.constant 9 : index
    %c0_16 = arith.constant 0 : index
    %14 = vector.load %arg14[%c0_15, %c9, %c0_16] : memref<1x32x32xbf16, #tpu.memory_space<vmem>>, vector<1x16x32xbf16>
    %15 = vector.shape_cast %14 : vector<1x16x32xbf16> to vector<16x32xbf16>
    %16 = tpu.concatenate %13, %9, %15 in 1 : vector<16x32xbf16>, vector<16x32xbf16>, vector<16x32xbf16> -> vector<16x96xbf16>
    %c0_17 = arith.constant 0 : index
    %c0_18 = arith.constant 0 : index
    %17 = vector.load %arg4[%c0_17, %c0_18] : memref<96x32xbf16, #tpu.memory_space<vmem>>, vector<96x32xbf16>
    %cst_19 = arith.constant dense<0.000000e+00> : vector<16x32xf32>
    %18 = tpu.matmul %16, %17, %cst_19 {dimension_numbers = #tpu.dot_dimension_numbers<[1], [0], [0], [1], [0, 0, 1, 1], [], []>} : vector<16x96xbf16>, vector<96x32xbf16>, vector<16x32xf32> -> vector<16x32xf32>
    %c0_20 = arith.constant 0 : index
    %c0_21 = arith.constant 0 : index
    %19 = vector.load %arg5[%c0_20, %c0_21] : memref<1x32xf32, #tpu.memory_space<vmem>>, vector<1x32xf32>
    %20 = vector.broadcast %19 : vector<1x32xf32> to vector<16x32xf32>
    %21 = arith.addf %18, %20 : vector<16x32xf32>
    %cst_22 = arith.constant 0.000000e+00 : f32
    %22 = vector.broadcast %cst_22 : f32 to vector<16x32xf32>
    %23 = arith.maximumf %21, %22 : vector<16x32xf32>
    %24 = arith.truncf %23 : vector<16x32xf32> to vector<16x32xbf16>
    %25 = vector.shape_cast %24 : vector<16x32xbf16> to vector<1x16x32xbf16>
    %c0_23 = arith.constant 0 : index
    %c8_24 = arith.constant 8 : index
    %c0_25 = arith.constant 0 : index
    %26 = vector.load %arg14[%c0_23, %c8_24, %c0_25] : memref<1x32x32xbf16, #tpu.memory_space<vmem>>, vector<1x16x32xbf16>
    tpu.vector_store %arg14[%c0_23, %c8_24, %c0_25], %25 {strides = array<i32>} : memref<1x32x32xbf16, #tpu.memory_space<vmem>>, vector<1x16x32xbf16>,
    %c0_26 = arith.constant 0 : index
    %c7_27 = arith.constant 7 : index
    %c0_28 = arith.constant 0 : index
    %27 = vector.load %arg14[%c0_26, %c7_27, %c0_28] : memref<1x32x32xbf16, #tpu.memory_space<vmem>>, vector<1x16x32xbf16>
    %28 = vector.shape_cast %27 : vector<1x16x32xbf16> to vector<16x32xbf16>
    %c0_29 = arith.constant 0 : index
    %c9_30 = arith.constant 9 : index
    %c0_31 = arith.constant 0 : index
    %29 = vector.load %arg14[%c0_29, %c9_30, %c0_31] : memref<1x32x32xbf16, #tpu.memory_space<vmem>>, vector<1x16x32xbf16>
    %30 = vector.shape_cast %29 : vector<1x16x32xbf16> to vector<16x32xbf16>
    %c0_32 = arith.constant 0 : index
    %c5 = arith.constant 5 : index
    %c0_33 = arith.constant 0 : index
    %31 = vector.load %arg14[%c0_32, %c5, %c0_33] : memref<1x32x32xbf16, #tpu.memory_space<vmem>>, vector<1x16x32xbf16>
    %32 = vector.shape_cast %31 : vector<1x16x32xbf16> to vector<16x32xbf16>
    %c0_34 = arith.constant 0 : index
    %c11 = arith.constant 11 : index
    %c0_35 = arith.constant 0 : index
    %33 = vector.load %arg14[%c0_34, %c11, %c0_35] : memref<1x32x32xbf16, #tpu.memory_space<vmem>>, vector<1x16x32xbf16>
    %34 = vector.shape_cast %33 : vector<1x16x32xbf16> to vector<16x32xbf16>
    %c0_36 = arith.constant 0 : index
    %c3 = arith.constant 3 : index
    %c0_37 = arith.constant 0 : index
    %35 = vector.load %arg14[%c0_36, %c3, %c0_37] : memref<1x32x32xbf16, #tpu.memory_space<vmem>>, vector<1x16x32xbf16>
    %36 = vector.shape_cast %35 : vector<1x16x32xbf16> to vector<16x32xbf16>
    %c0_38 = arith.constant 0 : index
    %c13 = arith.constant 13 : index
    %c0_39 = arith.constant 0 : index
    %37 = vector.load %arg14[%c0_38, %c13, %c0_39] : memref<1x32x32xbf16, #tpu.memory_space<vmem>>, vector<1x16x32xbf16>
    %38 = vector.shape_cast %37 : vector<1x16x32xbf16> to vector<16x32xbf16>
    %c0_40 = arith.constant 0 : index
    %c1 = arith.constant 1 : index
    %c0_41 = arith.constant 0 : index
    %39 = vector.load %arg14[%c0_40, %c1, %c0_41] : memref<1x32x32xbf16, #tpu.memory_space<vmem>>, vector<1x16x32xbf16>
    %40 = vector.shape_cast %39 : vector<1x16x32xbf16> to vector<16x32xbf16>
    %c0_42 = arith.constant 0 : index
    %c15 = arith.constant 15 : index
    %c0_43 = arith.constant 0 : index
    %41 = vector.load %arg14[%c0_42, %c15, %c0_43] : memref<1x32x32xbf16, #tpu.memory_space<vmem>>, vector<1x16x32xbf16>
    %42 = vector.shape_cast %41 : vector<1x16x32xbf16> to vector<16x32xbf16>
    %43 = tpu.concatenate %28, %30, %32, %34, %36, %38, %40, %42 in 1 : vector<16x32xbf16>, vector<16x32xbf16>, vector<16x32xbf16>, vector<16x32xbf16>, vector<16x32xbf16>, vector<16x32xbf16>, vector<16x32xbf16>, vector<16x32xbf16> -> vector<16x256xbf16>
    %c0_44 = arith.constant 0 : index
    %c0_45 = arith.constant 0 : index
    %44 = vector.load %arg6[%c0_44, %c0_45] : memref<32x32xbf16, #tpu.memory_space<vmem>>, vector<32x32xbf16>
    %cst_46 = arith.constant dense<0.000000e+00> : vector<16x32xf32>
    %45 = tpu.matmul %24, %44, %cst_46 {dimension_numbers = #tpu.dot_dimension_numbers<[1], [0], [0], [1], [0, 0, 1, 1], [], []>} : vector<16x32xbf16>, vector<32x32xbf16>, vector<16x32xf32> -> vector<16x32xf32>
    %c0_47 = arith.constant 0 : index
    %c0_48 = arith.constant 0 : index
    %46 = vector.load %arg7[%c0_47, %c0_48] : memref<256x32xbf16, #tpu.memory_space<vmem>>, vector<256x32xbf16>
    %cst_49 = arith.constant dense<0.000000e+00> : vector<16x32xf32>
    %47 = tpu.matmul %43, %46, %cst_49 {dimension_numbers = #tpu.dot_dimension_numbers<[1], [0], [0], [1], [0, 0, 1, 1], [], []>} : vector<16x256xbf16>, vector<256x32xbf16>, vector<16x32xf32> -> vector<16x32xf32>
    %48 = arith.addf %45, %47 : vector<16x32xf32>
    %c0_50 = arith.constant 0 : index
    %c0_51 = arith.constant 0 : index
    %49 = vector.load %arg8[%c0_50, %c0_51] : memref<1x32xf32, #tpu.memory_space<vmem>>, vector<1x32xf32>
    %50 = vector.broadcast %49 : vector<1x32xf32> to vector<16x32xf32>
    %51 = arith.addf %48, %50 : vector<16x32xf32>
    %cst_52 = arith.constant dense<0.000000e+00> : vector<32xf32>
    %52 = vector.multi_reduction <add>, %51, %cst_52 [0] : vector<16x32xf32> to vector<32xf32>
    %53 = vector.shape_cast %52 : vector<32xf32> to vector<1x32xf32>
    %cst_53 = arith.constant 1.600000e+01 : f32
    %54 = vector.broadcast %cst_53 : f32 to vector<1x32xf32>
    %55 = arith.divf %53, %54 : vector<1x32xf32>
    %c0_54 = arith.constant 0 : index
    %c0_55 = arith.constant 0 : index
    %56 = vector.load %arg9[%c0_54, %c0_55] : memref<32x8xf32, #tpu.memory_space<vmem>>, vector<32x8xf32>
    %cst_56 = arith.constant dense<0.000000e+00> : vector<1x8xf32>
    %57 = tpu.matmul %55, %56, %cst_56 {dimension_numbers = #tpu.dot_dimension_numbers<[1], [0], [0], [1], [0, 0, 1, 1], [], []>} : vector<1x32xf32>, vector<32x8xf32>, vector<1x8xf32> -> vector<1x8xf32>
    %c0_57 = arith.constant 0 : index
    %c0_58 = arith.constant 0 : index
    %58 = vector.load %arg10[%c0_57, %c0_58] : memref<1x8xf32, #tpu.memory_space<vmem>>, vector<1x8xf32>
    %59 = arith.addf %57, %58 : vector<1x8xf32>
    %cst_59 = arith.constant 0.000000e+00 : f32
    %60 = vector.broadcast %cst_59 : f32 to vector<1x8xf32>
    %61 = arith.maximumf %59, %60 : vector<1x8xf32>
    %c0_60 = arith.constant 0 : index
    %c0_61 = arith.constant 0 : index
    %62 = vector.load %arg11[%c0_60, %c0_61] : memref<8x32xf32, #tpu.memory_space<vmem>>, vector<8x32xf32>
    %cst_62 = arith.constant dense<0.000000e+00> : vector<1x32xf32>
    %63 = tpu.matmul %61, %62, %cst_62 {dimension_numbers = #tpu.dot_dimension_numbers<[1], [0], [0], [1], [0, 0, 1, 1], [], []>} : vector<1x8xf32>, vector<8x32xf32>, vector<1x32xf32> -> vector<1x32xf32>
    %c0_63 = arith.constant 0 : index
    %c0_64 = arith.constant 0 : index
    %64 = vector.load %arg12[%c0_63, %c0_64] : memref<1x32xf32, #tpu.memory_space<vmem>>, vector<1x32xf32>
    %65 = arith.addf %63, %64 : vector<1x32xf32>
    %cst_65 = arith.constant 0.000000e+00 : f32
    %66 = vector.broadcast %cst_65 : f32 to vector<1x32xf32>
    %67 = arith.subf %66, %65 : vector<1x32xf32>
    %68 = math.exp %67 : vector<1x32xf32>
    %cst_66 = arith.constant 1.000000e+00 : f32
    %69 = vector.broadcast %cst_66 : f32 to vector<1x32xf32>
    %70 = arith.addf %69, %68 : vector<1x32xf32>
    %cst_67 = arith.constant 1.000000e+00 : f32
    %71 = vector.broadcast %cst_67 : f32 to vector<1x32xf32>
    %72 = arith.divf %71, %70 : vector<1x32xf32>
    %73 = vector.broadcast %72 : vector<1x32xf32> to vector<16x32xf32>
    %74 = arith.mulf %73, %51 : vector<16x32xf32>
    %75 = arith.extf %9 : vector<16x32xbf16> to vector<16x32xf32>
    %76 = arith.addf %74, %75 : vector<16x32xf32>
    %cst_68 = arith.constant 0.000000e+00 : f32
    %77 = vector.broadcast %cst_68 : f32 to vector<16x32xf32>
    %78 = arith.maximumf %76, %77 : vector<16x32xf32>
    %79 = vector.shape_cast %78 : vector<16x32xf32> to vector<8x2x32xf32>
    %cst_69 = arith.constant dense<0xFF800000> : vector<8x32xf32>
    %80 = vector.multi_reduction <maximumf>, %79, %cst_69 [1] : vector<8x2x32xf32> to vector<8x32xf32>
    %c0_70 = arith.constant 0 : index
    %c0_71 = arith.constant 0 : index
    %81 = vector.load %arg13[%c0_70, %c0_71] : memref<8x32xf32, #tpu.memory_space<vmem>>, vector<8x32xf32>
    tpu.vector_store %arg13[%c0_70, %c0_71], %80 {strides = array<i32>} : memref<8x32xf32, #tpu.memory_space<vmem>>, vector<8x32xf32>,
    return
  }
  func.func @transform_0(%arg0: i32) -> (i32, i32) {
    %c0_i32 = arith.constant 0 : i32
    %c0_i32_0 = arith.constant 0 : i32
    return %arg0, %c0_i32 : i32, i32
  }
  func.func @transform_1(%arg0: i32) -> (i32, i32) {
    %c0_i32 = arith.constant 0 : i32
    %c0_i32_0 = arith.constant 0 : i32
    %c0_i32_1 = arith.constant 0 : i32
    return %c0_i32, %c0_i32_0 : i32, i32
  }
  func.func @transform_2(%arg0: i32) -> (i32, i32) {
    %c0_i32 = arith.constant 0 : i32
    %c0_i32_0 = arith.constant 0 : i32
    %c0_i32_1 = arith.constant 0 : i32
    return %c0_i32, %c0_i32_0 : i32, i32
  }
  func.func @transform_3(%arg0: i32) -> (i32, i32) {
    %c0_i32 = arith.constant 0 : i32
    %c0_i32_0 = arith.constant 0 : i32
    %c0_i32_1 = arith.constant 0 : i32
    return %c0_i32, %c0_i32_0 : i32, i32
  }
  func.func @transform_4(%arg0: i32) -> (i32, i32) {
    %c0_i32 = arith.constant 0 : i32
    %c0_i32_0 = arith.constant 0 : i32
    %c0_i32_1 = arith.constant 0 : i32
    return %c0_i32, %c0_i32_0 : i32, i32
  }
  func.func @transform_5(%arg0: i32) -> (i32, i32) {
    %c0_i32 = arith.constant 0 : i32
    %c0_i32_0 = arith.constant 0 : i32
    %c0_i32_1 = arith.constant 0 : i32
    return %c0_i32, %c0_i32_0 : i32, i32
  }
  func.func @transform_6(%arg0: i32) -> (i32, i32) {
    %c0_i32 = arith.constant 0 : i32
    %c0_i32_0 = arith.constant 0 : i32
    %c0_i32_1 = arith.constant 0 : i32
    return %c0_i32, %c0_i32_0 : i32, i32
  }
  func.func @transform_7(%arg0: i32) -> (i32, i32) {
    %c0_i32 = arith.constant 0 : i32
    %c0_i32_0 = arith.constant 0 : i32
    %c0_i32_1 = arith.constant 0 : i32
    return %c0_i32, %c0_i32_0 : i32, i32
  }
  func.func @transform_8(%arg0: i32) -> (i32, i32) {
    %c0_i32 = arith.constant 0 : i32
    %c0_i32_0 = arith.constant 0 : i32
    %c0_i32_1 = arith.constant 0 : i32
    return %c0_i32, %c0_i32_0 : i32, i32
  }
  func.func @transform_9(%arg0: i32) -> (i32, i32) {
    %c0_i32 = arith.constant 0 : i32
    %c0_i32_0 = arith.constant 0 : i32
    %c0_i32_1 = arith.constant 0 : i32
    return %c0_i32, %c0_i32_0 : i32, i32
  }
  func.func @transform_10(%arg0: i32) -> (i32, i32) {
    %c0_i32 = arith.constant 0 : i32
    %c0_i32_0 = arith.constant 0 : i32
    %c0_i32_1 = arith.constant 0 : i32
    return %c0_i32, %c0_i32_0 : i32, i32
  }
  func.func @transform_11(%arg0: i32) -> (i32, i32) {
    %c0_i32 = arith.constant 0 : i32
    %c0_i32_0 = arith.constant 0 : i32
    %c0_i32_1 = arith.constant 0 : i32
    return %c0_i32, %c0_i32_0 : i32, i32
  }
  func.func @transform_12(%arg0: i32) -> (i32, i32) {
    %c0_i32 = arith.constant 0 : i32
    %c0_i32_0 = arith.constant 0 : i32
    return %arg0, %c0_i32 : i32, i32
  }
}

</mosaic_0001>

<llo_original>
// kernel: tpu_custom_call.1
$region0: #{tpu_custom_call.1}
  #allocation0 [shape = 'u32[]', space=smem, size = 0x4, offset = 0x4, fixed_abs, tag = 'smem constant byte address 0x4 - core index']
  #allocation1 [shape = 'u32[72,128]{1,0:T(1,128)}', space=vmem, size = 0x9000, scoped, tag = 'internal scratch']
  #allocation2 [shape = 'bf16[1,32,32]{2,1,0:T(8,128)(2,1)}', space=vmem, size = 0x2000, scoped, tag = 'scratch operand']
  %s0 = inlined_call_operand.vmem [shape: bf16[32,4], index: 0, kind: input, shape index: {}]
  %s1 = inlined_call_operand.vmem [shape: bf16[4,32], index: 1, kind: input, shape index: {}]
  %s2 = inlined_call_operand.vmem [shape: f32[1,32], index: 2, kind: input, shape index: {}]
  %s3 = inlined_call_operand.vmem [shape: bf16[96,32], index: 3, kind: input, shape index: {}]
  %s4 = inlined_call_operand.vmem [shape: f32[1,32], index: 4, kind: input, shape index: {}]
  %s5 = inlined_call_operand.vmem [shape: bf16[32,32], index: 5, kind: input, shape index: {}]
  %s6 = inlined_call_operand.vmem [shape: bf16[256,32], index: 6, kind: input, shape index: {}]
  %s7 = inlined_call_operand.vmem [shape: f32[1,32], index: 7, kind: input, shape index: {}]
  %s8 = inlined_call_operand.vmem [shape: f32[32,8], index: 8, kind: input, shape index: {}]
  %s9 = inlined_call_operand.vmem [shape: f32[1,8], index: 9, kind: input, shape index: {}]
  %s10 = inlined_call_operand.vmem [shape: f32[8,32], index: 10, kind: input, shape index: {}]
  %s11 = inlined_call_operand.vmem [shape: f32[1,32], index: 11, kind: input, shape index: {}]
  %s12 = inlined_call_operand.hbm [shape: f32[16,32], index: 12, kind: output, shape index: {}]
  %s13 = sld [smem:[#allocation0]]
  $region81: #{tpu_custom_call.1} parent=0
    _
  %s15 = ssub.s32 1, %s13
  %s16 = scalar_select 0, %s15, %s13
  $region1: #{tpu_custom_call.1} parent=0
    #allocation3 [shape = 'u8[8192]{0}', space=vmem, size = 0x2000, scoped, tag = 'output window, operand 0']
    #allocation4 [shape = 's32[2]{0}', space=sflag, size = 0x8, scoped, tag = 'scoped memory for tpu_custom_call.1']
    %17 = vsyncpa [#allocation4], 0
    %s18 = scalar_lea.sflag [#allocation4], 1
    %19 = vsyncpa %s18, 0
    loop: start=0, step=1, limit=4
    $region2: #{tpu_custom_call.1} parent=1 // loop_pre_header
      _
    $region3: #{tpu_custom_call.1} parent=1 // loop_header
      %s21 = sphi 0, %s25
      %p22 = scmp.ge.s32.totalorder %s21, 4
      %s31 = sphi 0, %s33
      %s34 = sphi 0, %s31
      %s35 = sphi 0, %s34
      %s51 = sphi 0, %s35
      %s55 = sphi 0, %s55
      %s57 = sphi 0, %s55
      %s58 = sphi 0, %s57
      %s72 = sphi 0, %s58
      %s76 = sphi 0, %s76
      %s78 = sphi 0, %s76
      %s79 = sphi 0, %s78
      %s93 = sphi 0, %s79
      %s97 = sphi 0, %s97
      %s99 = sphi 0, %s97
      %s100 = sphi 0, %s99
      %s114 = sphi 0, %s100
      %s118 = sphi 0, %s118
      %s120 = sphi 0, %s118
      %s121 = sphi 0, %s120
      %s135 = sphi 0, %s121
      %s139 = sphi 0, %s139
      %s141 = sphi 0, %s139
      %s142 = sphi 0, %s141
      %s156 = sphi 0, %s142
      %s160 = sphi 0, %s160
      %s162 = sphi 0, %s160
      %s163 = sphi 0, %s162
      %s177 = sphi 0, %s163
      %s181 = sphi 0, %s181
      %s183 = sphi 0, %s181
      %s184 = sphi 0, %s183
      %s198 = sphi 0, %s184
      %s202 = sphi 0, %s202
      %s204 = sphi 0, %s202
      %s205 = sphi 0, %s204
      %s219 = sphi 0, %s205
      %s223 = sphi 0, %s223
      %s225 = sphi 0, %s223
      %s226 = sphi 0, %s225
      %s240 = sphi 0, %s226
      %s244 = sphi 0, %s244
      %s246 = sphi 0, %s244
      %s247 = sphi 0, %s246
      %s261 = sphi 0, %s247
      %s265 = sphi 0, %s265
      %s267 = sphi 0, %s265
      %s268 = sphi 0, %s267
      %s282 = sphi 0, %s268
      %s288 = sphi 0, %s290
      %s291 = sphi 0, %s288
      %s292 = sphi 0, %s291
      %s308 = sphi 0, %s292
    $region4: #{tpu_custom_call.1} parent=1 // loop_header_branch
      %24 = sbr.rel (%p22) target = $region8
    $region5: #{tpu_custom_call.1} parent=1 // loop_body
      %s26 = ssub.s32 %s21, 1
      %s27 = ssub.s32 %s21, 2
      %s28 = sadd.s32 %s21, 1
      %s29 = ssub.s32 %s21, %s28
      %p30 = scmp.eq.s32.totalorder %s29, 0
      %s32 = sadd.s32 %s31, 1
      %s33 = scalar_select %p30, %s31, %s32
      %p36 = pneg %p30
      %p37 = scmp.eq.s32.totalorder %s21, 1
      %p38 = por %p36, %p37
      %p39 = scmp.ne.s32.totalorder %s31, %s34
      %p40 = scmp.eq.s32.totalorder %s21, 0
      %p41 = por %p39, %p40
      %p42 = scmp.ne.s32.totalorder %s31, %s34
      %p43 = scmp.eq.s32.totalorder %s26, 1
      %p44 = por %p42, %p43
      %p45 = scmp.ne.s32.totalorder %s34, %s35
      %p46 = scmp.eq.s32.totalorder %s26, 0
      %p47 = por %p45, %p46
      %p48 = scmp.ne.s32.totalorder %s34, %s35
      %p49 = scmp.eq.s32.totalorder %s27, 1
      %p50 = por %p48, %p49
      %p52 = scmp.ne.s32.totalorder %s35, %s51
      %p53 = scmp.eq.s32.totalorder %s27, 0
      %p54 = por %p52, %p53
      %s56 = sadd.s32 %s55, 1
      %p59 = scmp.eq.s32.totalorder %s21, 1
      %p60 = scmp.ne.s32.totalorder %s55, %s57
      %p61 = scmp.eq.s32.totalorder %s21, 0
      %p62 = por %p60, %p61
      %p63 = scmp.ne.s32.totalorder %s55, %s57
      %p64 = scmp.eq.s32.totalorder %s26, 1
      %p65 = por %p63, %p64
      %p66 = scmp.ne.s32.totalorder %s57, %s58
      %p67 = scmp.eq.s32.totalorder %s26, 0
      %p68 = por %p66, %p67
      %p69 = scmp.ne.s32.totalorder %s57, %s58
      %p70 = scmp.eq.s32.totalorder %s27, 1
      %p71 = por %p69, %p70
      %p73 = scmp.ne.s32.totalorder %s58, %s72
      %p74 = scmp.eq.s32.totalorder %s27, 0
      %p75 = por %p73, %p74
      %s77 = sadd.s32 %s76, 1
      %p80 = scmp.eq.s32.totalorder %s21, 1
      %p81 = scmp.ne.s32.totalorder %s76, %s78
      %p82 = scmp.eq.s32.totalorder %s21, 0
      %p83 = por %p81, %p82
      %p84 = scmp.ne.s32.totalorder %s76, %s78
      %p85 = scmp.eq.s32.totalorder %s26, 1
      %p86 = por %p84, %p85
      %p87 = scmp.ne.s32.totalorder %s78, %s79
      %p88 = scmp.eq.s32.totalorder %s26, 0
      %p89 = por %p87, %p88
      %p90 = scmp.ne.s32.totalorder %s78, %s79
      %p91 = scmp.eq.s32.totalorder %s27, 1
      %p92 = por %p90, %p91
      %p94 = scmp.ne.s32.totalorder %s79, %s93
      %p95 = scmp.eq.s32.totalorder %s27, 0
      %p96 = por %p94, %p95
      %s98 = sadd.s32 %s97, 1
      %p101 = scmp.eq.s32.totalorder %s21, 1
      %p102 = scmp.ne.s32.totalorder %s97, %s99
      %p103 = scmp.eq.s32.totalorder %s21, 0
      %p104 = por %p102, %p103
      %p105 = scmp.ne.s32.totalorder %s97, %s99
      %p106 = scmp.eq.s32.totalorder %s26, 1
      %p107 = por %p105, %p106
      %p108 = scmp.ne.s32.totalorder %s99, %s100
      %p109 = scmp.eq.s32.totalorder %s26, 0
      %p110 = por %p108, %p109
      %p111 = scmp.ne.s32.totalorder %s99, %s100
      %p112 = scmp.eq.s32.totalorder %s27, 1
      %p113 = por %p111, %p112
      %p115 = scmp.ne.s32.totalorder %s100, %s114
      %p116 = scmp.eq.s32.totalorder %s27, 0
      %p117 = por %p115, %p116
      %s119 = sadd.s32 %s118, 1
      %p122 = scmp.eq.s32.totalorder %s21, 1
      %p123 = scmp.ne.s32.totalorder %s118, %s120
      %p124 = scmp.eq.s32.totalorder %s21, 0
      %p125 = por %p123, %p124
      %p126 = scmp.ne.s32.totalorder %s118, %s120
      %p127 = scmp.eq.s32.totalorder %s26, 1
      %p128 = por %p126, %p127
      %p129 = scmp.ne.s32.totalorder %s120, %s121
      %p130 = scmp.eq.s32.totalorder %s26, 0
      %p131 = por %p129, %p130
      %p132 = scmp.ne.s32.totalorder %s120, %s121
      %p133 = scmp.eq.s32.totalorder %s27, 1
      %p134 = por %p132, %p133
      %p136 = scmp.ne.s32.totalorder %s121, %s135
      %p137 = scmp.eq.s32.totalorder %s27, 0
      %p138 = por %p136, %p137
      %s140 = sadd.s32 %s139, 1
      %p143 = scmp.eq.s32.totalorder %s21, 1
      %p144 = scmp.ne.s32.totalorder %s139, %s141
      %p145 = scmp.eq.s32.totalorder %s21, 0
      %p146 = por %p144, %p145
      %p147 = scmp.ne.s32.totalorder %s139, %s141
      %p148 = scmp.eq.s32.totalorder %s26, 1
      %p149 = por %p147, %p148
      %p150 = scmp.ne.s32.totalorder %s141, %s142
      %p151 = scmp.eq.s32.totalorder %s26, 0
      %p152 = por %p150, %p151
      %p153 = scmp.ne.s32.totalorder %s141, %s142
      %p154 = scmp.eq.s32.totalorder %s27, 1
      %p155 = por %p153, %p154
      %p157 = scmp.ne.s32.totalorder %s142, %s156
      %p158 = scmp.eq.s32.totalorder %s27, 0
      %p159 = por %p157, %p158
      %s161 = sadd.s32 %s160, 1
      %p164 = scmp.eq.s32.totalorder %s21, 1
      %p165 = scmp.ne.s32.totalorder %s160, %s162
      %p166 = scmp.eq.s32.totalorder %s21, 0
      %p167 = por %p165, %p166
      %p168 = scmp.ne.s32.totalorder %s160, %s162
      %p169 = scmp.eq.s32.totalorder %s26, 1
      %p170 = por %p168, %p169
      %p171 = scmp.ne.s32.totalorder %s162, %s163
      %p172 = scmp.eq.s32.totalorder %s26, 0
      %p173 = por %p171, %p172
      %p174 = scmp.ne.s32.totalorder %s162, %s163
      %p175 = scmp.eq.s32.totalorder %s27, 1
      %p176 = por %p174, %p175
      %p178 = scmp.ne.s32.totalorder %s163, %s177
      %p179 = scmp.eq.s32.totalorder %s27, 0
      %p180 = por %p178, %p179
      %s182 = sadd.s32 %s181, 1
      %p185 = scmp.eq.s32.totalorder %s21, 1
      %p186 = scmp.ne.s32.totalorder %s181, %s183
      %p187 = scmp.eq.s32.totalorder %s21, 0
      %p188 = por %p186, %p187
      %p189 = scmp.ne.s32.totalorder %s181, %s183
      %p190 = scmp.eq.s32.totalorder %s26, 1
      %p191 = por %p189, %p190
      %p192 = scmp.ne.s32.totalorder %s183, %s184
      %p193 = scmp.eq.s32.totalorder %s26, 0
      %p194 = por %p192, %p193
      %p195 = scmp.ne.s32.totalorder %s183, %s184
      %p196 = scmp.eq.s32.totalorder %s27, 1
      %p197 = por %p195, %p196
      %p199 = scmp.ne.s32.totalorder %s184, %s198
      %p200 = scmp.eq.s32.totalorder %s27, 0
      %p201 = por %p199, %p200
      %s203 = sadd.s32 %s202, 1
      %p206 = scmp.eq.s32.totalorder %s21, 1
      %p207 = scmp.ne.s32.totalorder %s202, %s204
      %p208 = scmp.eq.s32.totalorder %s21, 0
      %p209 = por %p207, %p208
      %p210 = scmp.ne.s32.totalorder %s202, %s204
      %p211 = scmp.eq.s32.totalorder %s26, 1
      %p212 = por %p210, %p211
      %p213 = scmp.ne.s32.totalorder %s204, %s205
      %p214 = scmp.eq.s32.totalorder %s26, 0
      %p215 = por %p213, %p214
      %p216 = scmp.ne.s32.totalorder %s204, %s205
      %p217 = scmp.eq.s32.totalorder %s27, 1
      %p218 = por %p216, %p217
      %p220 = scmp.ne.s32.totalorder %s205, %s219
      %p221 = scmp.eq.s32.totalorder %s27, 0
      %p222 = por %p220, %p221
      %s224 = sadd.s32 %s223, 1
      %p227 = scmp.eq.s32.totalorder %s21, 1
      %p228 = scmp.ne.s32.totalorder %s223, %s225
      %p229 = scmp.eq.s32.totalorder %s21, 0
      %p230 = por %p228, %p229
      %p231 = scmp.ne.s32.totalorder %s223, %s225
      %p232 = scmp.eq.s32.totalorder %s26, 1
      %p233 = por %p231, %p232
      %p234 = scmp.ne.s32.totalorder %s225, %s226
      %p235 = scmp.eq.s32.totalorder %s26, 0
      %p236 = por %p234, %p235
      %p237 = scmp.ne.s32.totalorder %s225, %s226
      %p238 = scmp.eq.s32.totalorder %s27, 1
      %p239 = por %p237, %p238
      %p241 = scmp.ne.s32.totalorder %s226, %s240
      %p242 = scmp.eq.s32.totalorder %s27, 0
      %p243 = por %p241, %p242
      %s245 = sadd.s32 %s244, 1
      %p248 = scmp.eq.s32.totalorder %s21, 1
      %p249 = scmp.ne.s32.totalorder %s244, %s246
      %p250 = scmp.eq.s32.totalorder %s21, 0
      %p251 = por %p249, %p250
      %p252 = scmp.ne.s32.totalorder %s244, %s246
      %p253 = scmp.eq.s32.totalorder %s26, 1
      %p254 = por %p252, %p253
      %p255 = scmp.ne.s32.totalorder %s246, %s247
      %p256 = scmp.eq.s32.totalorder %s26, 0
      %p257 = por %p255, %p256
      %p258 = scmp.ne.s32.totalorder %s246, %s247
      %p259 = scmp.eq.s32.totalorder %s27, 1
      %p260 = por %p258, %p259
      %p262 = scmp.ne.s32.totalorder %s247, %s261
      %p263 = scmp.eq.s32.totalorder %s27, 0
      %p264 = por %p262, %p263
      %s266 = sadd.s32 %s265, 1
      %p269 = scmp.eq.s32.totalorder %s21, 1
      %p270 = scmp.ne.s32.totalorder %s265, %s267
      %p271 = scmp.eq.s32.totalorder %s21, 0
      %p272 = por %p270, %p271
      %p273 = scmp.ne.s32.totalorder %s265, %s267
      %p274 = scmp.eq.s32.totalorder %s26, 1
      %p275 = por %p273, %p274
      %p276 = scmp.ne.s32.totalorder %s267, %s268
      %p277 = scmp.eq.s32.totalorder %s26, 0
      %p278 = por %p276, %p277
      %p279 = scmp.ne.s32.totalorder %s267, %s268
      %p280 = scmp.eq.s32.totalorder %s27, 1
      %p281 = por %p279, %p280
      %p283 = scmp.ne.s32.totalorder %s268, %s282
      %p284 = scmp.eq.s32.totalorder %s27, 0
      %p285 = por %p283, %p284
      %s286 = ssub.s32 %s21, %s28
      %p287 = scmp.eq.s32.totalorder %s286, 0
      %s289 = sadd.s32 %s288, 1
      %s290 = scalar_select %p287, %s288, %s289
      %p293 = pneg %p287
      %p294 = scmp.eq.s32.totalorder %s21, 1
      %p295 = por %p293, %p294
      %p296 = scmp.ne.s32.totalorder %s288, %s291
      %p297 = scmp.eq.s32.totalorder %s21, 0
      %p298 = por %p296, %p297
      %p299 = scmp.ne.s32.totalorder %s288, %s291
      %p300 = scmp.eq.s32.totalorder %s26, 1
      %p301 = por %p299, %p300
      %p302 = scmp.ne.s32.totalorder %s291, %s292
      %p303 = scmp.eq.s32.totalorder %s26, 0
      %p304 = por %p302, %p303
      %p305 = scmp.ne.s32.totalorder %s291, %s292
      %p306 = scmp.eq.s32.totalorder %s27, 1
      %p307 = por %p305, %p306
      %p309 = scmp.ne.s32.totalorder %s292, %s308
      %p310 = scmp.eq.s32.totalorder %s27, 0
      %p311 = por %p309, %p310
      %p312 = scmp.le.s32.totalorder 1, %s21
      %p313 = scmp.lt.s32.totalorder %s21, 3
      %p314 = pnand %p312, %p313
      %p315 = pneg %p314
      // Predicated region
      $region9: #{tpu_custom_call.1} parent=5 // pred_check
        _
      $region10: #{tpu_custom_call.1} parent=5 // pred_check_branch
        %317 = sbr.rel (%p314) target = $region12
      $region11: #{tpu_custom_call.1} parent=5 // pred_region
        %s318 = ssub.s32 %s21, 1
        // Predicated region
        $region13: #{tpu_custom_call.1} parent=11 // pred_check
          %p319 = pneg %p68
        $region14: #{tpu_custom_call.1} parent=11 // pred_check_branch
          %321 = sbr.rel (%p319) target = $region16
        $region15: #{tpu_custom_call.1} parent=11 // pred_region
          _
        $region16: #{tpu_custom_call.1} parent=11 // pred_fallthru
          _
        // Predicated region
        $region17: #{tpu_custom_call.1} parent=11 // pred_check
          %p322 = pneg %p89
        $region18: #{tpu_custom_call.1} parent=11 // pred_check_branch
          %324 = sbr.rel (%p322) target = $region20
        $region19: #{tpu_custom_call.1} parent=11 // pred_region
          _
        $region20: #{tpu_custom_call.1} parent=11 // pred_fallthru
          _
        // Predicated region
        $region21: #{tpu_custom_call.1} parent=11 // pred_check
          %p325 = pneg %p110
        $region22: #{tpu_custom_call.1} parent=11 // pred_check_branch
          %327 = sbr.rel (%p325) target = $region24
        $region23: #{tpu_custom_call.1} parent=11 // pred_region
          _
        $region24: #{tpu_custom_call.1} parent=11 // pred_fallthru
          _
        // Predicated region
        $region25: #{tpu_custom_call.1} parent=11 // pred_check
          %p328 = pneg %p131
        $region26: #{tpu_custom_call.1} parent=11 // pred_check_branch
          %330 = sbr.rel (%p328) target = $region28
        $region27: #{tpu_custom_call.1} parent=11 // pred_region
          _
        $region28: #{tpu_custom_call.1} parent=11 // pred_fallthru
          _
        // Predicated region
        $region29: #{tpu_custom_call.1} parent=11 // pred_check
          %p331 = pneg %p152
        $region30: #{tpu_custom_call.1} parent=11 // pred_check_branch
          %333 = sbr.rel (%p331) target = $region32
        $region31: #{tpu_custom_call.1} parent=11 // pred_region
          _
        $region32: #{tpu_custom_call.1} parent=11 // pred_fallthru
          _
        // Predicated region
        $region33: #{tpu_custom_call.1} parent=11 // pred_check
          %p334 = pneg %p173
        $region34: #{tpu_custom_call.1} parent=11 // pred_check_branch
          %336 = sbr.rel (%p334) target = $region36
        $region35: #{tpu_custom_call.1} parent=11 // pred_region
          _
        $region36: #{tpu_custom_call.1} parent=11 // pred_fallthru
          _
        // Predicated region
        $region37: #{tpu_custom_call.1} parent=11 // pred_check
          %p337 = pneg %p194
        $region38: #{tpu_custom_call.1} parent=11 // pred_check_branch
          %339 = sbr.rel (%p337) target = $region40
        $region39: #{tpu_custom_call.1} parent=11 // pred_region
          _
        $region40: #{tpu_custom_call.1} parent=11 // pred_fallthru
          _
        // Predicated region
        $region41: #{tpu_custom_call.1} parent=11 // pred_check
          %p340 = pneg %p215
        $region42: #{tpu_custom_call.1} parent=11 // pred_check_branch
          %342 = sbr.rel (%p340) target = $region44
        $region43: #{tpu_custom_call.1} parent=11 // pred_region
          _
        $region44: #{tpu_custom_call.1} parent=11 // pred_fallthru
          _
        // Predicated region
        $region45: #{tpu_custom_call.1} parent=11 // pred_check
          %p343 = pneg %p236
        $region46: #{tpu_custom_call.1} parent=11 // pred_check_branch
          %345 = sbr.rel (%p343) target = $region48
        $region47: #{tpu_custom_call.1} parent=11 // pred_region
          _
        $region48: #{tpu_custom_call.1} parent=11 // pred_fallthru
          _
        // Predicated region
        $region49: #{tpu_custom_call.1} parent=11 // pred_check
          %p346 = pneg %p257
        $region50: #{tpu_custom_call.1} parent=11 // pred_check_branch
          %348 = sbr.rel (%p346) target = $region52
        $region51: #{tpu_custom_call.1} parent=11 // pred_region
          _
        $region52: #{tpu_custom_call.1} parent=11 // pred_fallthru
          _
        // Predicated region
        $region53: #{tpu_custom_call.1} parent=11 // pred_check
          %p349 = pneg %p278
        $region54: #{tpu_custom_call.1} parent=11 // pred_check_branch
          %351 = sbr.rel (%p349) target = $region56
        $region55: #{tpu_custom_call.1} parent=11 // pred_region
          _
        $region56: #{tpu_custom_call.1} parent=11 // pred_fallthru
          _
      $region12: #{tpu_custom_call.1} parent=5 // pred_fallthru
        _
      %p352 = scmp.lt.s32.totalorder %s21, 2
      // Predicated region
      $region57: #{tpu_custom_call.1} parent=5 // pred_check
        %p353 = pneg %p352
      $region58: #{tpu_custom_call.1} parent=5 // pred_check_branch
        %355 = sbr.rel (%p353) target = $region60
      $region59: #{tpu_custom_call.1} parent=5 // pred_region
        // Predicated region
        $region61: #{tpu_custom_call.1} parent=59 // pred_check
          %p356 = pneg %p41
        $region62: #{tpu_custom_call.1} parent=59 // pred_check_branch
          %358 = sbr.rel (%p356) target = $region64
        $region63: #{tpu_custom_call.1} parent=59 // pred_region
          %s359 = smul.u32 2, %s21
          %p360 = scmp.lt.s32.totalorder %s359, 3
          %s361 = scalar_select %p360, %s359, 3
          %s362 = smul.addr %s361, 4
          %s363 = scalar_lea.vmem %s0, %s362
          %s364 = smul.u32 2, %s21
        $region64: #{tpu_custom_call.1} parent=59 // pred_fallthru
          _
      $region60: #{tpu_custom_call.1} parent=5 // pred_fallthru
        _
      %p365 = scmp.le.s32.totalorder 1, %s21
      %p366 = scmp.lt.s32.totalorder %s21, 3
      %p367 = pnand %p365, %p366
      %p368 = pneg %p367
      // Predicated region
      $region65: #{tpu_custom_call.1} parent=5 // pred_check
        _
      $region66: #{tpu_custom_call.1} parent=5 // pred_check_branch
        %370 = sbr.rel (%p367) target = $region68
      $region67: #{tpu_custom_call.1} parent=5 // pred_region
        %s371 = ssub.s32 %s21, 1
        %s372 = smul.u32 2, %s26
        %p373 = scmp.lt.s32.totalorder %s372, 3
        %s374 = scalar_select %p373, %s372, 3
        %s375 = smul.addr %s374, 4
        %s376 = scalar_lea.vmem %s0, %s375
        %p377 = pneg %p47
        %p378 = pneg %p44
        %p379 = pneg %p68
        %p380 = pneg %p65
        %p381 = pneg %p89
        %p382 = pneg %p86
        %p383 = pneg %p110
        %p384 = pneg %p107
        %p385 = pneg %p131
        %p386 = pneg %p128
        %p387 = pneg %p152
        %p388 = pneg %p149
        %p389 = pneg %p173
        %p390 = pneg %p170
        %p391 = pneg %p194
        %p392 = pneg %p191
        %p393 = pneg %p215
        %p394 = pneg %p212
        %p395 = pneg %p236
        %p396 = pneg %p233
        %p397 = pneg %p257
        %p398 = pneg %p254
        %p399 = pneg %p278
        %p400 = pneg %p275
        %p401 = pneg %p304
        %p402 = pneg %p301
        %s403 = sand.u32 %s291, 1
        %s404 = scalar_lea.sflag [#allocation4], %s403
        %s405 = sand.u32 %s291, 1
        %s406 = smul.addr %s405, 8
        %s407 = scalar_lea.vmem [#allocation3], %s406
        %s408 = smul.u32 2, %s26
        %p409 = scmp.lt.s32.totalorder %s408, 3
        %s410 = scalar_select %p409, %s408, 3
        %s411 = smul.addr %s410, 4
        %s412 = scalar_lea.vmem %s0, %s411
        %s413 = smul.u32 2, %s26
        %vm415 = vcmask 257024
        %416 = vst.msk [vmem:[#allocation2] sm:$0xf] %vm415, 0
        %417 = vst.msk [vmem:[#allocation2 + $0xc] sm:$0xf] %vm415, 0
        %v418 = vld [vmem:[%s412] sm:$0xf]
        %v419 = vld [vmem:[%s412 + $0x4] sm:$0xf]
        %v420 = vld [vmem:[%s1] sm:$0x3]
        %v421 = vld [vmem:[%s2] sm:$0x1]
        %v423 = vperm.slane %v421, 0
        %v427 = vunpack.c.l.b16 %v418
        %v428 = vunpack.c.l.b16 %v419
        %v429 = vpack.c.b16 %v428, %v427
        %vm430 = vcmask 31744
        %v432 = vsel %vm430, %v429, 0
        %vm434 = vcmask 1041408
        %v436 = vsel %vm434, %v420, 0
        %438 = vmatpush.bf16.msra.mxu0 0
        %439 = vmatpush.bf16.msra.mxu0 0
        %440 = vmatpush.bf16.msra.mxu0 0
        %441 = vmatpush.bf16.msra.mxu0 0
        %442 = vmatpush.bf16.msra.mxu0 0
        %443 = vmatpush.bf16.msra.mxu0 0
        %444 = vmatpush.bf16.msra.mxu0 0
        %445 = vmatpush.bf16.msra.mxu0 %v436
        %446 = vmatmul.bf16.gmra.mxu0 %v432
        %v447 = vpop.f32.mrf.mxu0
        %v448 = vadd.f32 %v423, %v447
        %v449 = vpop.f32.mrf.mxu0
        %v450 = vadd.f32 %v423, %v449
        %451 = vdwg.mxu0
        %v452 = vpack.c.bf16 %v448, %v448
        %v453 = vpack.c.bf16 %v450, %v450
        %454 = vst.msk [vmem:[#allocation2 + $0x4] sm:$0xf] %vm415, %v452
        %455 = vst.msk [vmem:[#allocation2 + $0x8] sm:$0xf] %vm415, %v453
        %v456 = vld [vmem:[#allocation2] sm:$0x8]
        %v457 = vld [vmem:[#allocation2 + $0x4] sm:$0xf]
        %v458 = vld [vmem:[#allocation2 + $0x8] sm:$0xf]
        %v459 = vld [vmem:[#allocation2 + $0xc] sm:$0x1]
        %v463 = vunpack.c.l.b16 %v456
        %v464 = vunpack.c.l.b16 %v457
        %v465 = vunpack.c.l.b16 %v458
        %v466 = vpack.c.b16 %v464, %v463
        %v467 = vpack.c.b16 %v465, %v465
        %v470 = vunpack.c.l.b16 %v452
        %v471 = vunpack.c.l.b16 %v453
        %v472 = vpack.c.b16 %v471, %v470
        %v474 = vshrl.u32 %v472, 16
        %v476 = vrot.slane %v474, 4
        %v477 = vshll.u32 %v472, 16
        %v479 = vrot.slane %v477, 5
        %v480 = vor.u32 %v476, %v479
        %481 = vrot.lane.b32.xlu0 %v480, 32
        %v482 = vpop.permute.xlu0 %481
        %v484 = vunpack.c.l.b16 %v459
        %v485 = vpack.c.b16 %v465, %v464
        %v486 = vpack.c.b16 %v484, %v484
        %vm487 = vcmask 1042432
        %v488 = vrot.slane %v485, 5
        %v489 = vrot.slane %v486, 5
        %v490 = vsel %vm487, %v488, %v489
        %491 = vrot.lane.b32.xlu0 %v488, 64
        %v492 = vpop.permute.xlu0 %491
        %493 = vrot.lane.b32.xlu0 %v490, 64
        %v494 = vpop.permute.xlu0 %493
        %vm495 = vcmask 261120
        %v498 = vsel %vm495, %v466, %v482
        %v500 = vsel %vm495, %v467, %v482
        %vm501 = vcmask 523264
        %v503 = vsel %vm501, %v498, %v492
        %v505 = vsel %vm501, %v500, %v494
        %v506 = vld [vmem:[%s3] sm:$0xf]
        %v507 = vld [vmem:[%s3 + $0x4] sm:$0xf]
        %v508 = vld [vmem:[%s3 + $0x8] sm:$0xf]
        %v509 = vld [vmem:[%s3 + $0xc] sm:$0xf]
        %v510 = vld [vmem:[%s3 + $0x10] sm:$0xf]
        %v511 = vld [vmem:[%s3 + $0x14] sm:$0xf]
        %v512 = vld [vmem:[%s3 + $0x18] sm:$0xf]
        %v513 = vld [vmem:[%s3 + $0x1c] sm:$0xf]
        %v514 = vld [vmem:[%s3 + $0x20] sm:$0xf]
        %v515 = vld [vmem:[%s3 + $0x24] sm:$0xf]
        %v516 = vld [vmem:[%s3 + $0x28] sm:$0xf]
        %v517 = vld [vmem:[%s3 + $0x2c] sm:$0xf]
        %v518 = vld [vmem:[%s4] sm:$0x1]
        %v520 = vperm.slane %v518, 0
        %vm522 = vsmask.f32 4352
        %v523 = vshrl.u32 %v503, 16
        %v525 = vrot.slane %v523, 3
        %v526 = vshll.u32 %v503, 16
        %v528 = vrot.slane %v526, 4
        %v529 = vor.u32 %v525, %v528
        %v530 = vshrl.u32 %v505, 16
        %v532 = vrot.slane %v530, 3
        %v533 = vshll.u32 %v505, 16
        %v535 = vrot.slane %v533, 4
        %v536 = vor.u32 %v532, %v535
        %v537 = vsel %vm522, %v529, %v536
        %v550 = vunpack.c.l.b16 %v506
        %v551 = vunpack.c.l.b16 %v507
        %v552 = vunpack.c.l.b16 %v508
        %v553 = vunpack.c.l.b16 %v509
        %v554 = vunpack.c.l.b16 %v510
        %v555 = vunpack.c.l.b16 %v511
        %v556 = vunpack.c.l.b16 %v512
        %v557 = vunpack.c.l.b16 %v513
        %v558 = vunpack.c.l.b16 %v514
        %v559 = vunpack.c.l.b16 %v515
        %v560 = vunpack.c.l.b16 %v516
        %v561 = vunpack.c.l.b16 %v517
        %v562 = vpack.c.b16 %v551, %v550
        %v563 = vpack.c.b16 %v553, %v552
        %v564 = vpack.c.b16 %v555, %v554
        %v565 = vpack.c.b16 %v557, %v556
        %v566 = vpack.c.b16 %v559, %v558
        %v567 = vpack.c.b16 %v561, %v560
        %vm574 = vcmask 785408
        %v576 = vsel %vm574, %v537, 0
        %578 = vmatpush.bf16.msra.mxu0 0
        %579 = vmatpush.bf16.msra.mxu0 0
        %580 = vmatpush.bf16.msra.mxu0 %v567
        %581 = vmatpush.bf16.msra.mxu0 %v566
        %582 = vmatpush.bf16.msra.mxu0 %v565
        %583 = vmatpush.bf16.msra.mxu0 %v564
        %584 = vmatpush.bf16.msra.mxu0 %v563
        %585 = vmatpush.bf16.msra.mxu0 %v562
        %586 = vmatmul.bf16.gmra.mxu0 %v576
        %v587 = vpop.f32.mrf.mxu0
        %v588 = vadd.f32 %v520, %v587
        %v589 = vpop.f32.mrf.mxu0
        %v590 = vadd.f32 %v520, %v589
        %591 = vdwg.mxu0
        %v592 = vmax.f32 %v588, 0.0
        %v593 = vmax.f32 %v590, 0.0
        %v594 = vpack.c.bf16 %v592, %v592
        %v595 = vpack.c.bf16 %v593, %v593
        %596 = vst.msk [vmem:[#allocation2 + $0x4] sm:$0xf] %vm415, %v594
        %597 = vst.msk [vmem:[#allocation2 + $0x8] sm:$0xf] %vm415, %v595
        %v598 = vld [vmem:[#allocation2] sm:$0x8]
        %v599 = vld [vmem:[#allocation2 + $0x4] sm:$0xf]
        %v600 = vld [vmem:[#allocation2 + $0x8] sm:$0xf]
        %v601 = vld [vmem:[#allocation2 + $0xc] sm:$0x1]
        %v602 = vld [vmem:[#allocation2] sm:$0xc]
        %v603 = vld [vmem:[#allocation2 + $0x8] sm:$0x7]
        %v604 = vld [vmem:[#allocation2 + $0x4] sm:$0xe]
        %v605 = vld [vmem:[#allocation2 + $0xc] sm:$0x3]
        %v606 = vld [vmem:[#allocation2] sm:$0xe]
        %v607 = vld [vmem:[#allocation2 + $0x8] sm:$0x3]
        %v608 = vld [vmem:[#allocation2 + $0x4] sm:$0xc]
        %v609 = vld [vmem:[#allocation2 + $0xc] sm:$0x7]
        %v610 = vld [vmem:[#allocation2] sm:$0xf]
        %v611 = vld [vmem:[#allocation2 + $0x8] sm:$0x1]
        %v612 = vld [vmem:[#allocation2 + $0x4] sm:$0x8]
        %v613 = vld [vmem:[#allocation2 + $0xc] sm:$0xf]
        %v617 = vunpack.c.l.b16 %v598
        %v618 = vunpack.c.l.b16 %v599
        %v619 = vunpack.c.l.b16 %v600
        %v620 = vpack.c.b16 %v618, %v617
        %v621 = vpack.c.b16 %v619, %v619
        %v623 = vunpack.c.l.b16 %v601
        %v624 = vpack.c.b16 %v619, %v618
        %v625 = vpack.c.b16 %v623, %v623
        %v626 = vrot.slane %v624, 5
        %v627 = vrot.slane %v625, 5
        %v628 = vsel %vm487, %v626, %v627
        %629 = vrot.lane.b32.xlu0 %v626, 32
        %v630 = vpop.permute.xlu0 %629
        %631 = vrot.lane.b32.xlu0 %v628, 32
        %v632 = vpop.permute.xlu0 %631
        %v635 = vunpack.c.l.b16 %v602
        %v636 = vunpack.c.l.b16 %v603
        %v637 = vpack.c.b16 %v618, %v635
        %v638 = vpack.c.b16 %v636, %v636
        %vm639 = vcmask 1040384
        %v640 = vrot.slane %v637, 7
        %v641 = vrot.slane %v638, 7
        %v642 = vsel %vm639, %v640, %v641
        %643 = vrot.lane.b32.xlu0 %v640, 64
        %v644 = vpop.permute.xlu0 %643
        %645 = vrot.lane.b32.xlu0 %v642, 64
        %v646 = vpop.permute.xlu0 %645
        %v649 = vunpack.c.l.b16 %v604
        %v650 = vunpack.c.l.b16 %v605
        %v651 = vpack.c.b16 %v619, %v649
        %v652 = vpack.c.b16 %v650, %v650
        %vm653 = vcmask 1041408
        %v654 = vrot.slane %v651, 6
        %v655 = vrot.slane %v652, 6
        %v656 = vsel %vm653, %v654, %v655
        %657 = vrot.lane.b32.xlu0 %v654, 96
        %v658 = vpop.permute.xlu0 %657
        %659 = vrot.lane.b32.xlu0 %v656, 96
        %v660 = vpop.permute.xlu0 %659
        %v663 = vunpack.c.l.b16 %v606
        %v664 = vunpack.c.l.b16 %v607
        %v665 = vpack.c.b16 %v618, %v663
        %v666 = vpack.c.b16 %v664, %v664
        %v667 = vrot.slane %v665, 6
        %v668 = vrot.slane %v666, 6
        %v669 = vsel %vm653, %v667, %v668
        %v672 = vunpack.c.l.b16 %v608
        %v673 = vunpack.c.l.b16 %v609
        %v674 = vpack.c.b16 %v619, %v672
        %v675 = vpack.c.b16 %v673, %v673
        %v676 = vrot.slane %v674, 7
        %v677 = vrot.slane %v675, 7
        %v678 = vsel %vm639, %v676, %v677
        %679 = vrot.lane.b32.xlu0 %v676, 32
        %v680 = vpop.permute.xlu0 %679
        %681 = vrot.lane.b32.xlu0 %v678, 32
        %v682 = vpop.permute.xlu0 %681
        %v685 = vunpack.c.l.b16 %v610
        %v686 = vunpack.c.l.b16 %v611
        %v687 = vpack.c.b16 %v618, %v685
        %v688 = vpack.c.b16 %v686, %v686
        %v689 = vrot.slane %v687, 5
        %v690 = vrot.slane %v688, 5
        %v691 = vsel %vm487, %v689, %v690
        %692 = vrot.lane.b32.xlu0 %v689, 64
        %v693 = vpop.permute.xlu0 %692
        %694 = vrot.lane.b32.xlu0 %v691, 64
        %v695 = vpop.permute.xlu0 %694
        %v698 = vunpack.c.l.b16 %v612
        %v699 = vunpack.c.l.b16 %v613
        %v700 = vpack.c.b16 %v619, %v698
        %v701 = vpack.c.b16 %v699, %v699
        %702 = vrot.lane.b32.xlu0 %v700, 96
        %v703 = vpop.permute.xlu0 %702
        %704 = vrot.lane.b32.xlu0 %v701, 96
        %v705 = vpop.permute.xlu0 %704
        %v708 = vsel %vm495, %v620, %v630
        %v711 = vsel %vm495, %v621, %v632
        %v713 = vsel %vm501, %v708, %v644
        %v715 = vsel %vm501, %v711, %v646
        %v717 = vsel %vm574, %v713, %v658
        %v719 = vsel %vm574, %v715, %v660
        %v722 = vsel %vm495, %v667, %v680
        %v725 = vsel %vm495, %v669, %v682
        %v727 = vsel %vm501, %v722, %v693
        %v729 = vsel %vm501, %v725, %v695
        %v731 = vsel %vm574, %v727, %v703
        %v733 = vsel %vm574, %v729, %v705
        %v734 = vld [vmem:[%s5] sm:$0xf]
        %v735 = vld [vmem:[%s5 + $0x4] sm:$0xf]
        %v736 = vld [vmem:[%s5 + $0x8] sm:$0xf]
        %v737 = vld [vmem:[%s5 + $0xc] sm:$0xf]
        %v738 = vld [vmem:[%s6] sm:$0xf]
        %v739 = vld [vmem:[%s6 + $0x4] sm:$0xf]
        %v740 = vld [vmem:[%s6 + $0x8] sm:$0xf]
        %v741 = vld [vmem:[%s6 + $0xc] sm:$0xf]
        %v742 = vld [vmem:[%s6 + $0x10] sm:$0xf]
        %v743 = vld [vmem:[%s6 + $0x14] sm:$0xf]
        %v744 = vld [vmem:[%s6 + $0x18] sm:$0xf]
        %v745 = vld [vmem:[%s6 + $0x1c] sm:$0xf]
        %v746 = vld [vmem:[%s6 + $0x20] sm:$0xf]
        %v747 = vld [vmem:[%s6 + $0x24] sm:$0xf]
        %v748 = vld [vmem:[%s6 + $0x28] sm:$0xf]
        %v749 = vld [vmem:[%s6 + $0x2c] sm:$0xf]
        %v750 = vld [vmem:[%s6 + $0x30] sm:$0xf]
        %v751 = vld [vmem:[%s6 + $0x34] sm:$0xf]
        %v752 = vld [vmem:[%s6 + $0x38] sm:$0xf]
        %v753 = vld [vmem:[%s6 + $0x3c] sm:$0xf]
        %v754 = vld [vmem:[%s6 + $0x40] sm:$0xf]
        %v755 = vld [vmem:[%s6 + $0x44] sm:$0xf]
        %v756 = vld [vmem:[%s6 + $0x48] sm:$0xf]
        %v757 = vld [vmem:[%s6 + $0x4c] sm:$0xf]
        %v758 = vld [vmem:[%s6 + $0x50] sm:$0xf]
        %v759 = vld [vmem:[%s6 + $0x54] sm:$0xf]
        %v760 = vld [vmem:[%s6 + $0x58] sm:$0xf]
        %v761 = vld [vmem:[%s6 + $0x5c] sm:$0xf]
        %v762 = vld [vmem:[%s6 + $0x60] sm:$0xf]
        %v763 = vld [vmem:[%s6 + $0x64] sm:$0xf]
        %v764 = vld [vmem:[%s6 + $0x68] sm:$0xf]
        %v765 = vld [vmem:[%s6 + $0x6c] sm:$0xf]
        %v766 = vld [vmem:[%s6 + $0x70] sm:$0xf]
        %v767 = vld [vmem:[%s6 + $0x74] sm:$0xf]
        %v768 = vld [vmem:[%s6 + $0x78] sm:$0xf]
        %v769 = vld [vmem:[%s6 + $0x7c] sm:$0xf]
        %v770 = vshrl.u32 %v717, 16
        %v772 = vrot.slane %v770, 3
        %v773 = vshll.u32 %v717, 16
        %v775 = vrot.slane %v773, 4
        %v776 = vor.u32 %v772, %v775
        %v777 = vshrl.u32 %v719, 16
        %v779 = vrot.slane %v777, 3
        %v780 = vshll.u32 %v719, 16
        %v782 = vrot.slane %v780, 4
        %v783 = vor.u32 %v779, %v782
        %v784 = vsel %vm522, %v776, %v783
        %v785 = vshrl.u32 %v731, 16
        %v787 = vrot.slane %v785, 3
        %v788 = vshll.u32 %v731, 16
        %v790 = vrot.slane %v788, 4
        %v791 = vor.u32 %v787, %v790
        %v792 = vshrl.u32 %v733, 16
        %v794 = vrot.slane %v792, 3
        %v795 = vshll.u32 %v733, 16
        %v797 = vrot.slane %v795, 4
        %v798 = vor.u32 %v794, %v797
        %v799 = vsel %vm522, %v791, %v798
        %v834 = vunpack.c.l.b16 %v738
        %v835 = vunpack.c.l.b16 %v739
        %v836 = vunpack.c.l.b16 %v740
        %v837 = vunpack.c.l.b16 %v741
        %v838 = vunpack.c.l.b16 %v742
        %v839 = vunpack.c.l.b16 %v743
        %v840 = vunpack.c.l.b16 %v744
        %v841 = vunpack.c.l.b16 %v745
        %v842 = vunpack.c.l.b16 %v746
        %v843 = vunpack.c.l.b16 %v747
        %v844 = vunpack.c.l.b16 %v748
        %v845 = vunpack.c.l.b16 %v749
        %v846 = vunpack.c.l.b16 %v750
        %v847 = vunpack.c.l.b16 %v751
        %v848 = vunpack.c.l.b16 %v752
        %v849 = vunpack.c.l.b16 %v753
        %v850 = vunpack.c.l.b16 %v754
        %v851 = vunpack.c.l.b16 %v755
        %v852 = vunpack.c.l.b16 %v756
        %v853 = vunpack.c.l.b16 %v757
        %v854 = vunpack.c.l.b16 %v758
        %v855 = vunpack.c.l.b16 %v759
        %v856 = vunpack.c.l.b16 %v760
        %v857 = vunpack.c.l.b16 %v761
        %v858 = vunpack.c.l.b16 %v762
        %v859 = vunpack.c.l.b16 %v763
        %v860 = vunpack.c.l.b16 %v764
        %v861 = vunpack.c.l.b16 %v765
        %v862 = vunpack.c.l.b16 %v766
        %v863 = vunpack.c.l.b16 %v767
        %v864 = vunpack.c.l.b16 %v768
        %v865 = vunpack.c.l.b16 %v769
        %v866 = vpack.c.b16 %v835, %v834
        %v867 = vpack.c.b16 %v837, %v836
        %v868 = vpack.c.b16 %v839, %v838
        %v869 = vpack.c.b16 %v841, %v840
        %v870 = vpack.c.b16 %v843, %v842
        %v871 = vpack.c.b16 %v845, %v844
        %v872 = vpack.c.b16 %v847, %v846
        %v873 = vpack.c.b16 %v849, %v848
        %v874 = vpack.c.b16 %v851, %v850
        %v875 = vpack.c.b16 %v853, %v852
        %v876 = vpack.c.b16 %v855, %v854
        %v877 = vpack.c.b16 %v857, %v856
        %v878 = vpack.c.b16 %v859, %v858
        %v879 = vpack.c.b16 %v861, %v860
        %v880 = vpack.c.b16 %v863, %v862
        %v881 = vpack.c.b16 %v865, %v864
        %898 = vmatpush.bf16.msra.mxu0 %v873
        %899 = vmatpush.bf16.msra.mxu0 %v872
        %900 = vmatpush.bf16.msra.mxu0 %v871
        %901 = vmatpush.bf16.msra.mxu0 %v870
        %902 = vmatpush.bf16.msra.mxu0 %v869
        %903 = vmatpush.bf16.msra.mxu0 %v868
        %904 = vmatpush.bf16.msra.mxu0 %v867
        %905 = vmatpush.bf16.msra.mxu0 %v866
        %906 = vmatmul.bf16.gmra.mxu0 %v784
        %v907 = vpop.f32.mrf.mxu0
        %v908 = vadd.f32 0.0, %v907
        %v909 = vpop.f32.mrf.mxu0
        %v910 = vadd.f32 0.0, %v909
        %911 = vdwg.mxu0
        %912 = vmatpush.bf16.msra.mxu0 %v881
        %913 = vmatpush.bf16.msra.mxu0 %v880
        %914 = vmatpush.bf16.msra.mxu0 %v879
        %915 = vmatpush.bf16.msra.mxu0 %v878
        %916 = vmatpush.bf16.msra.mxu0 %v877
        %917 = vmatpush.bf16.msra.mxu0 %v876
        %918 = vmatpush.bf16.msra.mxu0 %v875
        %919 = vmatpush.bf16.msra.mxu0 %v874
        %920 = vmatmul.bf16.gmra.mxu0 %v799
        %v921 = vpop.f32.mrf.mxu0
        %v922 = vadd.f32 %v908, %v921
        %v923 = vpop.f32.mrf.mxu0
        %v924 = vadd.f32 %v910, %v923
        %925 = vdwg.mxu0
        %v928 = vunpack.c.l.b16 %v594
        %v929 = vunpack.c.l.b16 %v595
        %v930 = vpack.c.b16 %v929, %v928
        %v935 = vunpack.c.l.b16 %v734
        %v936 = vunpack.c.l.b16 %v735
        %v937 = vunpack.c.l.b16 %v736
        %v938 = vunpack.c.l.b16 %v737
        %v939 = vpack.c.b16 %v936, %v935
        %v940 = vpack.c.b16 %v938, %v937
        %v944 = vsel %vm495, %v930, 0
        %946 = vmatpush.bf16.msra.mxu0 0
        %947 = vmatpush.bf16.msra.mxu0 0
        %948 = vmatpush.bf16.msra.mxu0 0
        %949 = vmatpush.bf16.msra.mxu0 0
        %950 = vmatpush.bf16.msra.mxu0 0
        %951 = vmatpush.bf16.msra.mxu0 0
        %952 = vmatpush.bf16.msra.mxu0 %v940
        %953 = vmatpush.bf16.msra.mxu0 %v939
        %954 = vmatmul.bf16.gmra.mxu0 %v944
        %v955 = vpop.f32.mrf.mxu0
        %v956 = vadd.f32 %v922, %v955
        %v957 = vpop.f32.mrf.mxu0
        %v958 = vadd.f32 %v924, %v957
        %959 = vdwg.mxu0
        %v960 = vld [vmem:[%s7] sm:$0x1]
        %v962 = vperm.slane %v960, 0
        %v964 = vadd.f32 %v956, %v962
        %v965 = vadd.f32 %v958, %v962
        %v966 = vsel %vm495, %v964, 0.0
        %v967 = vsel %vm495, %v965, 0.0
        %v968 = vadd.f32 %v966, %v967
        %v969 = vrot.slane %v968, 4
        %v970 = vadd.f32 %v968, %v969
        %v971 = vrot.slane %v970, 2
        %v972 = vadd.f32 %v970, %v971
        %v973 = vrot.slane %v972, 1
        %v974 = vadd.f32 %v972, %v973
        %v975 = vrcp.pop 16.0
        %v976 = vmul.f32 16.0, %v975
        %v977 = vsub.f32 1.0, %v976
        %v978 = vmul.f32 %v975, %v977
        %v979 = vadd.f32 %v975, %v978
        %vm980 = vweird.f32 %v975
        %v981 = vsel %vm980, %v975, %v979
        %v982 = vmul.f32 %v974, %v981
        %v983 = vld [vmem:[%s8] sm:$0xff]
        %v984 = vld [vmem:[%s8 + $0x8] sm:$0xff]
        %v985 = vld [vmem:[%s8 + $0x10] sm:$0xff]
        %v986 = vld [vmem:[%s8 + $0x18] sm:$0xff]
        %v987 = vld [vmem:[%s9] sm:$0x1]
        %v989 = vsel %vm495, %v982, 0
        %991 = vmatpush.msra.mxu0 0.0
        %992 = vmatpush.msra.mxu0 0.0
        %993 = vmatpush.msra.mxu0 0.0
        %994 = vmatpush.msra.mxu0 0.0
        %995 = vmatpush.msra.mxu0 0.0
        %996 = vmatpush.msra.mxu0 0.0
        %997 = vmatpush.msra.mxu0 0.0
        %998 = vmatpush.msra.mxu0 0.0
        %999 = vmatpush.msra.mxu0 0.0
        %1000 = vmatpush.msra.mxu0 0.0
        %1001 = vmatpush.msra.mxu0 0.0
        %1002 = vmatpush.msra.mxu0 0.0
        %1003 = vmatpush.msra.mxu0 %v986
        %1004 = vmatpush.msra.mxu0 %v985
        %1005 = vmatpush.msra.mxu0 %v984
        %1006 = vmatpush.msra.mxu0 %v983
        %1007 = vmatmul.f32.gmra.mxu0 %v989
        %v1008 = vpop.f32.mrf.mxu0
        %v1009 = vadd.f32 %v987, %v1008
        %1010 = vdwg.mxu0
        %v1011 = vmax.f32 %v1009, 0.0
        %v1012 = vld [vmem:[%s10] sm:$0xff]
        %v1013 = vld [vmem:[%s11] sm:$0x1]
        %vm1014 = vcmask 64512
        %v1016 = vsel %vm1014, %v1011, 0
        %1018 = vmatpush.msra.mxu0 0.0
        %1019 = vmatpush.msra.mxu0 0.0
        %1020 = vmatpush.msra.mxu0 0.0
        %1021 = vmatpush.msra.mxu0 0.0
        %1022 = vmatpush.msra.mxu0 0.0
        %1023 = vmatpush.msra.mxu0 0.0
        %1024 = vmatpush.msra.mxu0 0.0
        %1025 = vmatpush.msra.mxu0 0.0
        %1026 = vmatpush.msra.mxu0 0.0
        %1027 = vmatpush.msra.mxu0 0.0
        %1028 = vmatpush.msra.mxu0 0.0
        %1029 = vmatpush.msra.mxu0 0.0
        %1030 = vmatpush.msra.mxu0 0.0
        %1031 = vmatpush.msra.mxu0 0.0
        %1032 = vmatpush.msra.mxu0 0.0
        %1033 = vmatpush.msra.mxu0 %v1012
        %1034 = vmatmul.f32.gmra.mxu0 %v1016
        %v1035 = vpop.f32.mrf.mxu0
        %v1036 = vadd.f32 %v1013, %v1035
        %1037 = vdwg.mxu0
        %v1038 = vsub.f32 0.0, %v1036
        %v1039 = vmul.f32 %v1038, 1.442695
        %v1040 = vpow.pop %v1039
        %v1041 = vadd.f32 %v1040, 1.0
        %v1042 = vrcp.pop %v1041
        %v1043 = vmul.f32 %v1041, %v1042
        %v1044 = vsub.f32 1.0, %v1043
        %v1045 = vmul.f32 %v1042, %v1044
        %v1046 = vadd.f32 %v1042, %v1045
        %vm1047 = vweird.f32 %v1041
        %vm1048 = vweird.f32 %v1042
        %vm1049 = vmor %vm1047, %vm1048
        %v1050 = vsel %vm1049, %v1042, %v1046
        %v1051 = vand.u32 2147483647, %v1041
        %vm1052 = vcmp.eq.f32.partialorder %v1051, 8.507059e+37
        %v1053 = vand.u32 %v1041, 2147483648
        %v1054 = vor.u32 1.1754944e-38, %v1053
        %v1055 = vsel %vm1052, %v1054, %v1050
        %v1056 = vmul.f32 1.0, %v1055
        %v1057 = vperm.slane %v1056, 0
        %v1058 = vmul.f32 %v1057, %v964
        %v1059 = vmul.f32 %v1057, %v965
        %v1060 = vunpack.c.l.bf16 %v452
        %v1061 = vunpack.c.l.bf16 %v453
        %v1062 = vadd.f32 %v1058, %v1060
        %v1063 = vadd.f32 %v1059, %v1061
        %v1064 = vmax.f32 %v1062, 0.0
        %v1065 = vmax.f32 %v1063, 0.0
        %v1068 = vrot.slane %v1064, 2
        %v1069 = vrot.slane %v1064, 4
        %v1070 = vrot.slane %v1064, 6
        %v1071 = vrot.slane %v1065, 2
        %v1072 = vrot.slane %v1065, 4
        %v1073 = vrot.slane %v1065, 6
        %vm1080 = vcmask 254976
        %v1081 = vsel %vm1080, %v1064, -inf
        %v1082 = vrot.slane %v1081, 4
        %v1083 = vmax.f32 %v1081, %v1082
        %v1084 = vrot.slane %v1083, 2
        %v1085 = vmax.f32 %v1083, %v1084
        %v1086 = vrot.slane %v1085, 1
        %v1087 = vmax.f32 %v1085, %v1086
        %v1088 = vsel %vm1080, %v1068, -inf
        %v1089 = vrot.slane %v1088, 4
        %v1090 = vmax.f32 %v1088, %v1089
        %v1091 = vrot.slane %v1090, 2
        %v1092 = vmax.f32 %v1090, %v1091
        %v1093 = vrot.slane %v1092, 1
        %v1094 = vmax.f32 %v1092, %v1093
        %v1095 = vsel %vm1080, %v1069, -inf
        %v1096 = vrot.slane %v1095, 4
        %v1097 = vmax.f32 %v1095, %v1096
        %v1098 = vrot.slane %v1097, 2
        %v1099 = vmax.f32 %v1097, %v1098
        %v1100 = vrot.slane %v1099, 1
        %v1101 = vmax.f32 %v1099, %v1100
        %v1102 = vsel %vm1080, %v1070, -inf
        %v1103 = vrot.slane %v1102, 4
        %v1104 = vmax.f32 %v1102, %v1103
        %v1105 = vrot.slane %v1104, 2
        %v1106 = vmax.f32 %v1104, %v1105
        %v1107 = vrot.slane %v1106, 1
        %v1108 = vmax.f32 %v1106, %v1107
        %v1109 = vsel %vm1080, %v1065, -inf
        %v1110 = vrot.slane %v1109, 4
        %v1111 = vmax.f32 %v1109, %v1110
        %v1112 = vrot.slane %v1111, 2
        %v1113 = vmax.f32 %v1111, %v1112
        %v1114 = vrot.slane %v1113, 1
        %v1115 = vmax.f32 %v1113, %v1114
        %v1116 = vsel %vm1080, %v1071, -inf
        %v1117 = vrot.slane %v1116, 4
        %v1118 = vmax.f32 %v1116, %v1117
        %v1119 = vrot.slane %v1118, 2
        %v1120 = vmax.f32 %v1118, %v1119
        %v1121 = vrot.slane %v1120, 1
        %v1122 = vmax.f32 %v1120, %v1121
        %v1123 = vsel %vm1080, %v1072, -inf
        %v1124 = vrot.slane %v1123, 4
        %v1125 = vmax.f32 %v1123, %v1124
        %v1126 = vrot.slane %v1125, 2
        %v1127 = vmax.f32 %v1125, %v1126
        %v1128 = vrot.slane %v1127, 1
        %v1129 = vmax.f32 %v1127, %v1128
        %v1130 = vsel %vm1080, %v1073, -inf
        %v1131 = vrot.slane %v1130, 4
        %v1132 = vmax.f32 %v1130, %v1131
        %v1133 = vrot.slane %v1132, 2
        %v1134 = vmax.f32 %v1132, %v1133
        %v1135 = vrot.slane %v1134, 1
        %v1136 = vmax.f32 %v1134, %v1135
        %vm1145 = vcmask 1041409
        %v1146 = vsel %vm1145, %v1094, %v1087
        %vm1147 = vcmask 1042434
        %v1148 = vsel %vm1147, %v1101, %v1146
        %vm1149 = vcmask 1043459
        %v1150 = vsel %vm1149, %v1108, %v1148
        %vm1151 = vcmask 1044484
        %v1152 = vsel %vm1151, %v1115, %v1150
        %vm1153 = vcmask 1045509
        %v1154 = vsel %vm1153, %v1122, %v1152
        %vm1155 = vcmask 1046534
        %v1156 = vsel %vm1155, %v1129, %v1154
        %vm1157 = vcmask 1047559
        %v1158 = vsel %vm1157, %v1136, %v1156
        %1160 = vst.msk [vmem:[%s407] sm:$0xff] %vm495, %v1158
        %s1161 = sand.u32 %s291, 1
        %s1162 = scalar_lea.sflag [#allocation4], %s1161
        %s1163 = sand.u32 %s291, 1
        %s1164 = smul.addr %s1163, 8
        %s1165 = scalar_lea.vmem [#allocation3], %s1164
        // Predicated region
        $region69: #{tpu_custom_call.1} parent=67 // pred_check
          %p1166 = pneg %p301
        $region70: #{tpu_custom_call.1} parent=67 // pred_check_branch
          %1168 = sbr.rel (%p1166) target = $region72
        $region71: #{tpu_custom_call.1} parent=67 // pred_region
          %1170 = vsyncadd %s1162, 0
          %s1171 = smul.addr %s26, 8
          %s1172 = scalar_lea.hbm %s12, %s1171
          %s1174 = sshll.u32 %s1165, 4
          %s1175 = int_to_ptr.vmem [resolvable:$true] %s1174
          %s1176 = sshll.u32 %s1172, 4
          %s1177 = int_to_ptr.hbm [resolvable:$true] %s1176
          %1179 = dma.vmem_to_hbm [thread:$0]  %s1175, 128, %s1177, %s1162
        $region72: #{tpu_custom_call.1} parent=67 // pred_fallthru
          _
      $region68: #{tpu_custom_call.1} parent=5 // pred_fallthru
        _
      %p1180 = scmp.le.s32.totalorder 2, %s21
      // Predicated region
      $region73: #{tpu_custom_call.1} parent=5 // pred_check
        %p1181 = pneg %p1180
      $region74: #{tpu_custom_call.1} parent=5 // pred_check_branch
        %1183 = sbr.rel (%p1181) target = $region76
      $region75: #{tpu_custom_call.1} parent=5 // pred_region
        %s1184 = ssub.s32 %s21, 2
        // Predicated region
        $region77: #{tpu_custom_call.1} parent=75 // pred_check
          %p1185 = pneg %p307
        $region78: #{tpu_custom_call.1} parent=75 // pred_check_branch
          %1187 = sbr.rel (%p1185) target = $region80
        $region79: #{tpu_custom_call.1} parent=75 // pred_region
          %s1188 = sand.u32 %s292, 1
          %s1189 = scalar_lea.sflag [#allocation4], %s1188
          %s1190 = sand.u32 %s292, 1
          %s1191 = smul.addr %s1190, 8
          %s1192 = scalar_lea.vmem [#allocation3], %s1191
          %1194 = dma.done %s1189, 128
        $region80: #{tpu_custom_call.1} parent=75 // pred_fallthru
          _
      $region76: #{tpu_custom_call.1} parent=5 // pred_fallthru
        _
    $region6: #{tpu_custom_call.1} parent=1 // loop_footer
      %s25 = sadd.s32 1, %s21
    $region7: #{tpu_custom_call.1} parent=1 // loop_footer_branch
      %20 = sbr.rel target = $region3
    $region8: #{tpu_custom_call.1} parent=1 // loop_exit
      _
    %1195 = vsyncpa [#allocation4], 1
    %s1196 = scalar_lea.sflag [#allocation4], 1
    %1197 = vsyncpa %s1196, 1

// kernel: tpu_custom_call.1
$region0: #{tpu_custom_call.1}
  #allocation0 [shape = 'u32[]', space=smem, size = 0x4, offset = 0x4, fixed_abs, tag = 'smem constant byte address 0x4 - core index']
  #allocation1 [shape = 'u32[72,128]{1,0:T(1,128)}', space=vmem, size = 0x9000, scoped, tag = 'internal scratch']
  #allocation2 [shape = 'bf16[1,32,32]{2,1,0:T(8,128)(2,1)}', space=vmem, size = 0x2000, scoped, tag = 'scratch operand']
  %s0 = inlined_call_operand.vmem [shape: bf16[32,4], index: 0, kind: input, shape index: {}]
  %s1 = inlined_call_operand.vmem [shape: bf16[4,32], index: 1, kind: input, shape index: {}]
  %s2 = inlined_call_operand.vmem [shape: f32[1,32], index: 2, kind: input, shape index: {}]
  %s3 = inlined_call_operand.vmem [shape: bf16[96,32], index: 3, kind: input, shape index: {}]
  %s4 = inlined_call_operand.vmem [shape: f32[1,32], index: 4, kind: input, shape index: {}]
  %s5 = inlined_call_operand.vmem [shape: bf16[32,32], index: 5, kind: input, shape index: {}]
  %s6 = inlined_call_operand.vmem [shape: bf16[256,32], index: 6, kind: input, shape index: {}]
  %s7 = inlined_call_operand.vmem [shape: f32[1,32], index: 7, kind: input, shape index: {}]
  %s8 = inlined_call_operand.vmem [shape: f32[32,8], index: 8, kind: input, shape index: {}]
  %s9 = inlined_call_operand.vmem [shape: f32[1,8], index: 9, kind: input, shape index: {}]
  %s10 = inlined_call_operand.vmem [shape: f32[8,32], index: 10, kind: input, shape index: {}]
  %s11 = inlined_call_operand.vmem [shape: f32[1,32], index: 11, kind: input, shape index: {}]
  %s12 = inlined_call_operand.hbm [shape: f32[16,32], index: 12, kind: output, shape index: {}]
  %s13 = sld [smem:[#allocation0]]
  $region81: #{tpu_custom_call.1} parent=0
    _
  %s15 = ssub.s32 1, %s13
  %s16 = scalar_select 0, %s15, %s13
  $region1: #{tpu_custom_call.1} parent=0
    #allocation3 [shape = 'u8[8192]{0}', space=vmem, size = 0x2000, scoped, tag = 'output window, operand 0']
    #allocation4 [shape = 's32[2]{0}', space=sflag, size = 0x8, scoped, tag = 'scoped memory for tpu_custom_call.1']
    %17 = vsyncpa [#allocation4], 0
    %s18 = scalar_lea.sflag [#allocation4], 1
    %19 = vsyncpa %s18, 0
    loop: start=0, step=1, limit=4
    $region2: #{tpu_custom_call.1} parent=1 // loop_pre_header
      _
    $region3: #{tpu_custom_call.1} parent=1 // loop_header
      %s21 = sphi 0, %s25
      %p22 = scmp.ge.s32.totalorder %s21, 4
      %s31 = sphi 0, %s33
      %s34 = sphi 0, %s31
      %s35 = sphi 0, %s34
      %s51 = sphi 0, %s35
      %s55 = sphi 0, %s55
      %s57 = sphi 0, %s55
      %s58 = sphi 0, %s57
      %s72 = sphi 0, %s58
      %s76 = sphi 0, %s76
      %s78 = sphi 0, %s76
      %s79 = sphi 0, %s78
      %s93 = sphi 0, %s79
      %s97 = sphi 0, %s97
      %s99 = sphi 0, %s97
      %s100 = sphi 0, %s99
      %s114 = sphi 0, %s100
      %s118 = sphi 0, %s118
      %s120 = sphi 0, %s118
      %s121 = sphi 0, %s120
      %s135 = sphi 0, %s121
      %s139 = sphi 0, %s139
      %s141 = sphi 0, %s139
      %s142 = sphi 0, %s141
      %s156 = sphi 0, %s142
      %s160 = sphi 0, %s160
      %s162 = sphi 0, %s160
      %s163 = sphi 0, %s162
      %s177 = sphi 0, %s163
      %s181 = sphi 0, %s181
      %s183 = sphi 0, %s181
      %s184 = sphi 0, %s183
      %s198 = sphi 0, %s184
      %s202 = sphi 0, %s202
      %s204 = sphi 0, %s202
      %s205 = sphi 0, %s204
      %s219 = sphi 0, %s205
      %s223 = sphi 0, %s223
      %s225 = sphi 0, %s223
      %s226 = sphi 0, %s225
      %s240 = sphi 0, %s226
      %s244 = sphi 0, %s244
      %s246 = sphi 0, %s244
      %s247 = sphi 0, %s246
      %s261 = sphi 0, %s247
      %s265 = sphi 0, %s265
      %s267 = sphi 0, %s265
      %s268 = sphi 0, %s267
      %s282 = sphi 0, %s268
      %s288 = sphi 0, %s290
      %s291 = sphi 0, %s288
      %s292 = sphi 0, %s291
      %s308 = sphi 0, %s292
    $region4: #{tpu_custom_call.1} parent=1 // loop_header_branch
      %24 = sbr.rel (%p22) target = $region8
    $region5: #{tpu_custom_call.1} parent=1 // loop_body
      %s26 = ssub.s32 %s21, 1
      %s27 = ssub.s32 %s21, 2
      %s28 = sadd.s32 %s21, 1
      %s29 = ssub.s32 %s21, %s28
      %p30 = scmp.eq.s32.totalorder %s29, 0
      %s32 = sadd.s32 %s31, 1
      %s33 = scalar_select %p30, %s31, %s32
      %p36 = pneg %p30
      %p37 = scmp.eq.s32.totalorder %s21, 1
      %p38 = por %p36, %p37
      %p39 = scmp.ne.s32.totalorder %s31, %s34
      %p40 = scmp.eq.s32.totalorder %s21, 0
      %p41 = por %p39, %p40
      %p42 = scmp.ne.s32.totalorder %s31, %s34
      %p43 = scmp.eq.s32.totalorder %s26, 1
      %p44 = por %p42, %p43
      %p45 = scmp.ne.s32.totalorder %s34, %s35
      %p46 = scmp.eq.s32.totalorder %s26, 0
      %p47 = por %p45, %p46
      %p48 = scmp.ne.s32.totalorder %s34, %s35
      %p49 = scmp.eq.s32.totalorder %s27, 1
      %p50 = por %p48, %p49
      %p52 = scmp.ne.s32.totalorder %s35, %s51
      %p53 = scmp.eq.s32.totalorder %s27, 0
      %p54 = por %p52, %p53
      %s56 = sadd.s32 %s55, 1
      %p59 = scmp.eq.s32.totalorder %s21, 1
      %p60 = scmp.ne.s32.totalorder %s55, %s57
      %p61 = scmp.eq.s32.totalorder %s21, 0
      %p62 = por %p60, %p61
      %p63 = scmp.ne.s32.totalorder %s55, %s57
      %p64 = scmp.eq.s32.totalorder %s26, 1
      %p65 = por %p63, %p64
      %p66 = scmp.ne.s32.totalorder %s57, %s58
      %p67 = scmp.eq.s32.totalorder %s26, 0
      %p68 = por %p66, %p67
      %p69 = scmp.ne.s32.totalorder %s57, %s58
      %p70 = scmp.eq.s32.totalorder %s27, 1
      %p71 = por %p69, %p70
      %p73 = scmp.ne.s32.totalorder %s58, %s72
      %p74 = scmp.eq.s32.totalorder %s27, 0
      %p75 = por %p73, %p74
      %s77 = sadd.s32 %s76, 1
      %p80 = scmp.eq.s32.totalorder %s21, 1
      %p81 = scmp.ne.s32.totalorder %s76, %s78
      %p82 = scmp.eq.s32.totalorder %s21, 0
      %p83 = por %p81, %p82
      %p84 = scmp.ne.s32.totalorder %s76, %s78
      %p85 = scmp.eq.s32.totalorder %s26, 1
      %p86 = por %p84, %p85
      %p87 = scmp.ne.s32.totalorder %s78, %s79
      %p88 = scmp.eq.s32.totalorder %s26, 0
      %p89 = por %p87, %p88
      %p90 = scmp.ne.s32.totalorder %s78, %s79
      %p91 = scmp.eq.s32.totalorder %s27, 1
      %p92 = por %p90, %p91
      %p94 = scmp.ne.s32.totalorder %s79, %s93
      %p95 = scmp.eq.s32.totalorder %s27, 0
      %p96 = por %p94, %p95
      %s98 = sadd.s32 %s97, 1
      %p101 = scmp.eq.s32.totalorder %s21, 1
      %p102 = scmp.ne.s32.totalorder %s97, %s99
      %p103 = scmp.eq.s32.totalorder %s21, 0
      %p104 = por %p102, %p103
      %p105 = scmp.ne.s32.totalorder %s97, %s99
      %p106 = scmp.eq.s32.totalorder %s26, 1
      %p107 = por %p105, %p106
      %p108 = scmp.ne.s32.totalorder %s99, %s100
      %p109 = scmp.eq.s32.totalorder %s26, 0
      %p110 = por %p108, %p109
      %p111 = scmp.ne.s32.totalorder %s99, %s100
      %p112 = scmp.eq.s32.totalorder %s27, 1
      %p113 = por %p111, %p112
      %p115 = scmp.ne.s32.totalorder %s100, %s114
      %p116 = scmp.eq.s32.totalorder %s27, 0
      %p117 = por %p115, %p116
      %s119 = sadd.s32 %s118, 1
      %p122 = scmp.eq.s32.totalorder %s21, 1
      %p123 = scmp.ne.s32.totalorder %s118, %s120
      %p124 = scmp.eq.s32.totalorder %s21, 0
      %p125 = por %p123, %p124
      %p126 = scmp.ne.s32.totalorder %s118, %s120
      %p127 = scmp.eq.s32.totalorder %s26, 1
      %p128 = por %p126, %p127
      %p129 = scmp.ne.s32.totalorder %s120, %s121
      %p130 = scmp.eq.s32.totalorder %s26, 0
      %p131 = por %p129, %p130
      %p132 = scmp.ne.s32.totalorder %s120, %s121
      %p133 = scmp.eq.s32.totalorder %s27, 1
      %p134 = por %p132, %p133
      %p136 = scmp.ne.s32.totalorder %s121, %s135
      %p137 = scmp.eq.s32.totalorder %s27, 0
      %p138 = por %p136, %p137
      %s140 = sadd.s32 %s139, 1
      %p143 = scmp.eq.s32.totalorder %s21, 1
      %p144 = scmp.ne.s32.totalorder %s139, %s141
      %p145 = scmp.eq.s32.totalorder %s21, 0
      %p146 = por %p144, %p145
      %p147 = scmp.ne.s32.totalorder %s139, %s141
      %p148 = scmp.eq.s32.totalorder %s26, 1
      %p149 = por %p147, %p148
      %p150 = scmp.ne.s32.totalorder %s141, %s142
      %p151 = scmp.eq.s32.totalorder %s26, 0
      %p152 = por %p150, %p151
      %p153 = scmp.ne.s32.totalorder %s141, %s142
      %p154 = scmp.eq.s32.totalorder %s27, 1
      %p155 = por %p153, %p154
      %p157 = scmp.ne.s32.totalorder %s142, %s156
      %p158 = scmp.eq.s32.totalorder %s27, 0
      %p159 = por %p157, %p158
      %s161 = sadd.s32 %s160, 1
      %p164 = scmp.eq.s32.totalorder %s21, 1
      %p165 = scmp.ne.s32.totalorder %s160, %s162
      %p166 = scmp.eq.s32.totalorder %s21, 0
      %p167 = por %p165, %p166
      %p168 = scmp.ne.s32.totalorder %s160, %s162
      %p169 = scmp.eq.s32.totalorder %s26, 1
      %p170 = por %p168, %p169
      %p171 = scmp.ne.s32.totalorder %s162, %s163
      %p172 = scmp.eq.s32.totalorder %s26, 0
      %p173 = por %p171, %p172
      %p174 = scmp.ne.s32.totalorder %s162, %s163
      %p175 = scmp.eq.s32.totalorder %s27, 1
      %p176 = por %p174, %p175
      %p178 = scmp.ne.s32.totalorder %s163, %s177
      %p179 = scmp.eq.s32.totalorder %s27, 0
      %p180 = por %p178, %p179
      %s182 = sadd.s32 %s181, 1
      %p185 = scmp.eq.s32.totalorder %s21, 1
      %p186 = scmp.ne.s32.totalorder %s181, %s183
      %p187 = scmp.eq.s32.totalorder %s21, 0
      %p188 = por %p186, %p187
      %p189 = scmp.ne.s32.totalorder %s181, %s183
      %p190 = scmp.eq.s32.totalorder %s26, 1
      %p191 = por %p189, %p190
      %p192 = scmp.ne.s32.totalorder %s183, %s184
      %p193 = scmp.eq.s32.totalorder %s26, 0
      %p194 = por %p192, %p193
      %p195 = scmp.ne.s32.totalorder %s183, %s184
      %p196 = scmp.eq.s32.totalorder %s27, 1
      %p197 = por %p195, %p196
      %p199 = scmp.ne.s32.totalorder %s184, %s198
      %p200 = scmp.eq.s32.totalorder %s27, 0
      %p201 = por %p199, %p200
      %s203 = sadd.s32 %s202, 1
      %p206 = scmp.eq.s32.totalorder %s21, 1
      %p207 = scmp.ne.s32.totalorder %s202, %s204
      %p208 = scmp.eq.s32.totalorder %s21, 0
      %p209 = por %p207, %p208
      %p210 = scmp.ne.s32.totalorder %s202, %s204
      %p211 = scmp.eq.s32.totalorder %s26, 1
      %p212 = por %p210, %p211
      %p213 = scmp.ne.s32.totalorder %s204, %s205
      %p214 = scmp.eq.s32.totalorder %s26, 0
      %p215 = por %p213, %p214
      %p216 = scmp.ne.s32.totalorder %s204, %s205
      %p217 = scmp.eq.s32.totalorder %s27, 1
      %p218 = por %p216, %p217
      %p220 = scmp.ne.s32.totalorder %s205, %s219
      %p221 = scmp.eq.s32.totalorder %s27, 0
      %p222 = por %p220, %p221
      %s224 = sadd.s32 %s223, 1
      %p227 = scmp.eq.s32.totalorder %s21, 1
      %p228 = scmp.ne.s32.totalorder %s223, %s225
      %p229 = scmp.eq.s32.totalorder %s21, 0
      %p230 = por %p228, %p229
      %p231 = scmp.ne.s32.totalorder %s223, %s225
      %p232 = scmp.eq.s32.totalorder %s26, 1
      %p233 = por %p231, %p232
      %p234 = scmp.ne.s32.totalorder %s225, %s226
      %p235 = scmp.eq.s32.totalorder %s26, 0
      %p236 = por %p234, %p235
      %p237 = scmp.ne.s32.totalorder %s225, %s226
      %p238 = scmp.eq.s32.totalorder %s27, 1
      %p239 = por %p237, %p238
      %p241 = scmp.ne.s32.totalorder %s226, %s240
      %p242 = scmp.eq.s32.totalorder %s27, 0
      %p243 = por %p241, %p242
      %s245 = sadd.s32 %s244, 1
      %p248 = scmp.eq.s32.totalorder %s21, 1
      %p249 = scmp.ne.s32.totalorder %s244, %s246
      %p250 = scmp.eq.s32.totalorder %s21, 0
      %p251 = por %p249, %p250
      %p252 = scmp.ne.s32.totalorder %s244, %s246
      %p253 = scmp.eq.s32.totalorder %s26, 1
      %p254 = por %p252, %p253
      %p255 = scmp.ne.s32.totalorder %s246, %s247
      %p256 = scmp.eq.s32.totalorder %s26, 0
      %p257 = por %p255, %p256
      %p258 = scmp.ne.s32.totalorder %s246, %s247
      %p259 = scmp.eq.s32.totalorder %s27, 1
      %p260 = por %p258, %p259
      %p262 = scmp.ne.s32.totalorder %s247, %s261
      %p263 = scmp.eq.s32.totalorder %s27, 0
      %p264 = por %p262, %p263
      %s266 = sadd.s32 %s265, 1
      %p269 = scmp.eq.s32.totalorder %s21, 1
      %p270 = scmp.ne.s32.totalorder %s265, %s267
      %p271 = scmp.eq.s32.totalorder %s21, 0
      %p272 = por %p270, %p271
      %p273 = scmp.ne.s32.totalorder %s265, %s267
      %p274 = scmp.eq.s32.totalorder %s26, 1
      %p275 = por %p273, %p274
      %p276 = scmp.ne.s32.totalorder %s267, %s268
      %p277 = scmp.eq.s32.totalorder %s26, 0
      %p278 = por %p276, %p277
      %p279 = scmp.ne.s32.totalorder %s267, %s268
      %p280 = scmp.eq.s32.totalorder %s27, 1
      %p281 = por %p279, %p280
      %p283 = scmp.ne.s32.totalorder %s268, %s282
      %p284 = scmp.eq.s32.totalorder %s27, 0
      %p285 = por %p283, %p284
      %s286 = ssub.s32 %s21, %s28
      %p287 = scmp.eq.s32.totalorder %s286, 0
      %s289 = sadd.s32 %s288, 1
      %s290 = scalar_select %p287, %s288, %s289
      %p293 = pneg %p287
      %p294 = scmp.eq.s32.totalorder %s21, 1
      %p295 = por %p293, %p294
      %p296 = scmp.ne.s32.totalorder %s288, %s291
      %p297 = scmp.eq.s32.totalorder %s21, 0
      %p298 = por %p296, %p297
      %p299 = scmp.ne.s32.totalorder %s288, %s291
      %p300 = scmp.eq.s32.totalorder %s26, 1
      %p301 = por %p299, %p300
      %p302 = scmp.ne.s32.totalorder %s291, %s292
      %p303 = scmp.eq.s32.totalorder %s26, 0
      %p304 = por %p302, %p303
      %p305 = scmp.ne.s32.totalorder %s291, %s292
      %p306 = scmp.eq.s32.totalorder %s27, 1
      %p307 = por %p305, %p306
      %p309 = scmp.ne.s32.totalorder %s292, %s308
      %p310 = scmp.eq.s32.totalorder %s27, 0
      %p311 = por %p309, %p310
      %p312 = scmp.le.s32.totalorder 1, %s21
      %p313 = scmp.lt.s32.totalorder %s21, 3
      %p314 = pnand %p312, %p313
      %p315 = pneg %p314
      // Predicated region
      $region9: #{tpu_custom_call.1} parent=5 // pred_check
        _
      $region10: #{tpu_custom_call.1} parent=5 // pred_check_branch
        %317 = sbr.rel (%p314) target = $region12
      $region11: #{tpu_custom_call.1} parent=5 // pred_region
        %s318 = ssub.s32 %s21, 1
        // Predicated region
        $region13: #{tpu_custom_call.1} parent=11 // pred_check
          %p319 = pneg %p68
        $region14: #{tpu_custom_call.1} parent=11 // pred_check_branch
          %321 = sbr.rel (%p319) target = $region16
        $region15: #{tpu_custom_call.1} parent=11 // pred_region
          _
        $region16: #{tpu_custom_call.1} parent=11 // pred_fallthru
          _
        // Predicated region
        $region17: #{tpu_custom_call.1} parent=11 // pred_check
          %p322 = pneg %p89
        $region18: #{tpu_custom_call.1} parent=11 // pred_check_branch
          %324 = sbr.rel (%p322) target = $region20
        $region19: #{tpu_custom_call.1} parent=11 // pred_region
          _
        $region20: #{tpu_custom_call.1} parent=11 // pred_fallthru
          _
        // Predicated region
        $region21: #{tpu_custom_call.1} parent=11 // pred_check
          %p325 = pneg %p110
        $region22: #{tpu_custom_call.1} parent=11 // pred_check_branch
          %327 = sbr.rel (%p325) target = $region24
        $region23: #{tpu_custom_call.1} parent=11 // pred_region
          _
        $region24: #{tpu_custom_call.1} parent=11 // pred_fallthru
          _
        // Predicated region
        $region25: #{tpu_custom_call.1} parent=11 // pred_check
          %p328 = pneg %p131
        $region26: #{tpu_custom_call.1} parent=11 // pred_check_branch
          %330 = sbr.rel (%p328) target = $region28
        $region27: #{tpu_custom_call.1} parent=11 // pred_region
          _
        $region28: #{tpu_custom_call.1} parent=11 // pred_fallthru
          _
        // Predicated region
        $region29: #{tpu_custom_call.1} parent=11 // pred_check
          %p331 = pneg %p152
        $region30: #{tpu_custom_call.1} parent=11 // pred_check_branch
          %333 = sbr.rel (%p331) target = $region32
        $region31: #{tpu_custom_call.1} parent=11 // pred_region
          _
        $region32: #{tpu_custom_call.1} parent=11 // pred_fallthru
          _
        // Predicated region
        $region33: #{tpu_custom_call.1} parent=11 // pred_check
          %p334 = pneg %p173
        $region34: #{tpu_custom_call.1} parent=11 // pred_check_branch
          %336 = sbr.rel (%p334) target = $region36
        $region35: #{tpu_custom_call.1} parent=11 // pred_region
          _
        $region36: #{tpu_custom_call.1} parent=11 // pred_fallthru
          _
        // Predicated region
        $region37: #{tpu_custom_call.1} parent=11 // pred_check
          %p337 = pneg %p194
        $region38: #{tpu_custom_call.1} parent=11 // pred_check_branch
          %339 = sbr.rel (%p337) target = $region40
        $region39: #{tpu_custom_call.1} parent=11 // pred_region
          _
        $region40: #{tpu_custom_call.1} parent=11 // pred_fallthru
          _
        // Predicated region
        $region41: #{tpu_custom_call.1} parent=11 // pred_check
          %p340 = pneg %p215
        $region42: #{tpu_custom_call.1} parent=11 // pred_check_branch
          %342 = sbr.rel (%p340) target = $region44
        $region43: #{tpu_custom_call.1} parent=11 // pred_region
          _
        $region44: #{tpu_custom_call.1} parent=11 // pred_fallthru
          _
        // Predicated region
        $region45: #{tpu_custom_call.1} parent=11 // pred_check
          %p343 = pneg %p236
        $region46: #{tpu_custom_call.1} parent=11 // pred_check_branch
          %345 = sbr.rel (%p343) target = $region48
        $region47: #{tpu_custom_call.1} parent=11 // pred_region
          _
        $region48: #{tpu_custom_call.1} parent=11 // pred_fallthru
          _
        // Predicated region
        $region49: #{tpu_custom_call.1} parent=11 // pred_check
          %p346 = pneg %p257
        $region50: #{tpu_custom_call.1} parent=11 // pred_check_branch
          %348 = sbr.rel (%p346) target = $region52
        $region51: #{tpu_custom_call.1} parent=11 // pred_region
          _
        $region52: #{tpu_custom_call.1} parent=11 // pred_fallthru
          _
        // Predicated region
        $region53: #{tpu_custom_call.1} parent=11 // pred_check
          %p349 = pneg %p278
        $region54: #{tpu_custom_call.1} parent=11 // pred_check_branch
          %351 = sbr.rel (%p349) target = $region56
        $region55: #{tpu_custom_call.1} parent=11 // pred_region
          _
        $region56: #{tpu_custom_call.1} parent=11 // pred_fallthru
          _
      $region12: #{tpu_custom_call.1} parent=5 // pred_fallthru
        _
      %p352 = scmp.lt.s32.totalorder %s21, 2
      // Predicated region
      $region57: #{tpu_custom_call.1} parent=5 // pred_check
        %p353 = pneg %p352
      $region58: #{tpu_custom_call.1} parent=5 // pred_check_branch
        %355 = sbr.rel (%p353) target = $region60
      $region59: #{tpu_custom_call.1} parent=5 // pred_region
        // Predicated region
        $region61: #{tpu_custom_call.1} parent=59 // pred_check
          %p356 = pneg %p41
        $region62: #{tpu_custom_call.1} parent=59 // pred_check_branch
          %358 = sbr.rel (%p356) target = $region64
        $region63: #{tpu_custom_call.1} parent=59 // pred_region
          %s359 = smul.u32 2, %s21
          %p360 = scmp.lt.s32.totalorder %s359, 3
          %s361 = scalar_select %p360, %s359, 3
          %s362 = smul.addr %s361, 4
          %s363 = scalar_lea.vmem %s0, %s362
          %s364 = smul.u32 2, %s21
        $region64: #{tpu_custom_call.1} parent=59 // pred_fallthru
          _
      $region60: #{tpu_custom_call.1} parent=5 // pred_fallthru
        _
      %p365 = scmp.le.s32.totalorder 1, %s21
      %p366 = scmp.lt.s32.totalorder %s21, 3
      %p367 = pnand %p365, %p366
      %p368 = pneg %p367
      // Predicated region
      $region65: #{tpu_custom_call.1} parent=5 // pred_check
        _
      $region66: #{tpu_custom_call.1} parent=5 // pred_check_branch
        %370 = sbr.rel (%p367) target = $region68
      $region67: #{tpu_custom_call.1} parent=5 // pred_region
        %s371 = ssub.s32 %s21, 1
        %s372 = smul.u32 2, %s26
        %p373 = scmp.lt.s32.totalorder %s372, 3
        %s374 = scalar_select %p373, %s372, 3
        %s375 = smul.addr %s374, 4
        %s376 = scalar_lea.vmem %s0, %s375
        %p377 = pneg %p47
        %p378 = pneg %p44
        %p379 = pneg %p68
        %p380 = pneg %p65
        %p381 = pneg %p89
        %p382 = pneg %p86
        %p383 = pneg %p110
        %p384 = pneg %p107
        %p385 = pneg %p131
        %p386 = pneg %p128
        %p387 = pneg %p152
        %p388 = pneg %p149
        %p389 = pneg %p173
        %p390 = pneg %p170
        %p391 = pneg %p194
        %p392 = pneg %p191
        %p393 = pneg %p215
        %p394 = pneg %p212
        %p395 = pneg %p236
        %p396 = pneg %p233
        %p397 = pneg %p257
        %p398 = pneg %p254
        %p399 = pneg %p278
        %p400 = pneg %p275
        %p401 = pneg %p304
        %p402 = pneg %p301
        %s403 = sand.u32 %s291, 1
        %s404 = scalar_lea.sflag [#allocation4], %s403
        %s405 = sand.u32 %s291, 1
        %s406 = smul.addr %s405, 8
        %s407 = scalar_lea.vmem [#allocation3], %s406
        %s408 = smul.u32 2, %s26
        %p409 = scmp.lt.s32.totalorder %s408, 3
        %s410 = scalar_select %p409, %s408, 3
        %s411 = smul.addr %s410, 4
        %s412 = scalar_lea.vmem %s0, %s411
        %s413 = smul.u32 2, %s26
        %vm415 = vcmask 257024
        %416 = vst.msk [vmem:[#allocation2] sm:$0xf] %vm415, 0
        %417 = vst.msk [vmem:[#allocation2 + $0xc] sm:$0xf] %vm415, 0
        %v418 = vld [vmem:[%s412] sm:$0xf]
        %v419 = vld [vmem:[%s412 + $0x4] sm:$0xf]
        %v420 = vld [vmem:[%s1] sm:$0x3]
        %v421 = vld [vmem:[%s2] sm:$0x1]
        %v423 = vperm.slane %v421, 0
        %v427 = vunpack.c.l.b16 %v418
        %v428 = vunpack.c.l.b16 %v419
        %v429 = vpack.c.b16 %v428, %v427
        %vm430 = vcmask 31744
        %v432 = vsel %vm430, %v429, 0
        %vm434 = vcmask 1041408
        %v436 = vsel %vm434, %v420, 0
        %438 = vmatpush.bf16.msra.mxu0 0
        %439 = vmatpush.bf16.msra.mxu0 0
        %440 = vmatpush.bf16.msra.mxu0 0
        %441 = vmatpush.bf16.msra.mxu0 0
        %442 = vmatpush.bf16.msra.mxu0 0
        %443 = vmatpush.bf16.msra.mxu0 0
        %444 = vmatpush.bf16.msra.mxu0 0
        %445 = vmatpush.bf16.msra.mxu0 %v436
        %446 = vmatmul.bf16.gmra.mxu0 %v432
        %v447 = vpop.f32.mrf.mxu0
        %v448 = vadd.f32 %v423, %v447
        %v449 = vpop.f32.mrf.mxu0
        %v450 = vadd.f32 %v423, %v449
        %451 = vdwg.mxu0
        %v452 = vpack.c.bf16 %v448, %v448
        %v453 = vpack.c.bf16 %v450, %v450
        %454 = vst.msk [vmem:[#allocation2 + $0x4] sm:$0xf] %vm415, %v452
        %455 = vst.msk [vmem:[#allocation2 + $0x8] sm:$0xf] %vm415, %v453
        %v456 = vld [vmem:[#allocation2] sm:$0x8]
        %v457 = vld [vmem:[#allocation2 + $0x4] sm:$0xf]
        %v458 = vld [vmem:[#allocation2 + $0x8] sm:$0xf]
        %v459 = vld [vmem:[#allocation2 + $0xc] sm:$0x1]
        %v463 = vunpack.c.l.b16 %v456
        %v464 = vunpack.c.l.b16 %v457
        %v465 = vunpack.c.l.b16 %v458
        %v466 = vpack.c.b16 %v464, %v463
        %v467 = vpack.c.b16 %v465, %v465
        %v470 = vunpack.c.l.b16 %v452
        %v471 = vunpack.c.l.b16 %v453
        %v472 = vpack.c.b16 %v471, %v470
        %v474 = vshrl.u32 %v472, 16
        %v476 = vrot.slane %v474, 4
        %v477 = vshll.u32 %v472, 16
        %v479 = vrot.slane %v477, 5
        %v480 = vor.u32 %v476, %v479
        %481 = vrot.lane.b32.xlu0 %v480, 32
        %v482 = vpop.permute.xlu0 %481
        %v484 = vunpack.c.l.b16 %v459
        %v485 = vpack.c.b16 %v465, %v464
        %v486 = vpack.c.b16 %v484, %v484
        %vm487 = vcmask 1042432
        %v488 = vrot.slane %v485, 5
        %v489 = vrot.slane %v486, 5
        %v490 = vsel %vm487, %v488, %v489
        %491 = vrot.lane.b32.xlu0 %v488, 64
        %v492 = vpop.permute.xlu0 %491
        %493 = vrot.lane.b32.xlu0 %v490, 64
        %v494 = vpop.permute.xlu0 %493
        %vm495 = vcmask 261120
        %v498 = vsel %vm495, %v466, %v482
        %v500 = vsel %vm495, %v467, %v482
        %vm501 = vcmask 523264
        %v503 = vsel %vm501, %v498, %v492
        %v505 = vsel %vm501, %v500, %v494
        %v506 = vld [vmem:[%s3] sm:$0xf]
        %v507 = vld [vmem:[%s3 + $0x4] sm:$0xf]
        %v508 = vld [vmem:[%s3 + $0x8] sm:$0xf]
        %v509 = vld [vmem:[%s3 + $0xc] sm:$0xf]
        %v510 = vld [vmem:[%s3 + $0x10] sm:$0xf]
        %v511 = vld [vmem:[%s3 + $0x14] sm:$0xf]
        %v512 = vld [vmem:[%s3 + $0x18] sm:$0xf]
        %v513 = vld [vmem:[%s3 + $0x1c] sm:$0xf]
        %v514 = vld [vmem:[%s3 + $0x20] sm:$0xf]
        %v515 = vld [vmem:[%s3 + $0x24] sm:$0xf]
        %v516 = vld [vmem:[%s3 + $0x28] sm:$0xf]
        %v517 = vld [vmem:[%s3 + $0x2c] sm:$0xf]
        %v518 = vld [vmem:[%s4] sm:$0x1]
        %v520 = vperm.slane %v518, 0
        %vm522 = vsmask.f32 4352
        %v523 = vshrl.u32 %v503, 16
        %v525 = vrot.slane %v523, 3
        %v526 = vshll.u32 %v503, 16
        %v528 = vrot.slane %v526, 4
        %v529 = vor.u32 %v525, %v528
        %v530 = vshrl.u32 %v505, 16
        %v532 = vrot.slane %v530, 3
        %v533 = vshll.u32 %v505, 16
        %v535 = vrot.slane %v533, 4
        %v536 = vor.u32 %v532, %v535
        %v537 = vsel %vm522, %v529, %v536
        %v550 = vunpack.c.l.b16 %v506
        %v551 = vunpack.c.l.b16 %v507
        %v552 = vunpack.c.l.b16 %v508
        %v553 = vunpack.c.l.b16 %v509
        %v554 = vunpack.c.l.b16 %v510
        %v555 = vunpack.c.l.b16 %v511
        %v556 = vunpack.c.l.b16 %v512
        %v557 = vunpack.c.l.b16 %v513
        %v558 = vunpack.c.l.b16 %v514
        %v559 = vunpack.c.l.b16 %v515
        %v560 = vunpack.c.l.b16 %v516
        %v561 = vunpack.c.l.b16 %v517
        %v562 = vpack.c.b16 %v551, %v550
        %v563 = vpack.c.b16 %v553, %v552
        %v564 = vpack.c.b16 %v555, %v554
        %v565 = vpack.c.b16 %v557, %v556
        %v566 = vpack.c.b16 %v559, %v558
        %v567 = vpack.c.b16 %v561, %v560
        %vm574 = vcmask 785408
        %v576 = vsel %vm574, %v537, 0
        %578 = vmatpush.bf16.msra.mxu0 0
        %579 = vmatpush.bf16.msra.mxu0 0
        %580 = vmatpush.bf16.msra.mxu0 %v567
        %581 = vmatpush.bf16.msra.mxu0 %v566
        %582 = vmatpush.bf16.msra.mxu0 %v565
        %583 = vmatpush.bf16.msra.mxu0 %v564
        %584 = vmatpush.bf16.msra.mxu0 %v563
        %585 = vmatpush.bf16.msra.mxu0 %v562
        %586 = vmatmul.bf16.gmra.mxu0 %v576
        %v587 = vpop.f32.mrf.mxu0
        %v588 = vadd.f32 %v520, %v587
        %v589 = vpop.f32.mrf.mxu0
        %v590 = vadd.f32 %v520, %v589
        %591 = vdwg.mxu0
        %v592 = vmax.f32 %v588, 0.0
        %v593 = vmax.f32 %v590, 0.0
        %v594 = vpack.c.bf16 %v592, %v592
        %v595 = vpack.c.bf16 %v593, %v593
        %596 = vst.msk [vmem:[#allocation2 + $0x4] sm:$0xf] %vm415, %v594
        %597 = vst.msk [vmem:[#allocation2 + $0x8] sm:$0xf] %vm415, %v595
        %v598 = vld [vmem:[#allocation2] sm:$0x8]
        %v599 = vld [vmem:[#allocation2 + $0x4] sm:$0xf]
        %v600 = vld [vmem:[#allocation2 + $0x8] sm:$0xf]
        %v601 = vld [vmem:[#allocation2 + $0xc] sm:$0x1]
        %v602 = vld [vmem:[#allocation2] sm:$0xc]
        %v603 = vld [vmem:[#allocation2 + $0x8] sm:$0x7]
        %v604 = vld [vmem:[#allocation2 + $0x4] sm:$0xe]
        %v605 = vld [vmem:[#allocation2 + $0xc] sm:$0x3]
        %v606 = vld [vmem:[#allocation2] sm:$0xe]
        %v607 = vld [vmem:[#allocation2 + $0x8] sm:$0x3]
        %v608 = vld [vmem:[#allocation2 + $0x4] sm:$0xc]
        %v609 = vld [vmem:[#allocation2 + $0xc] sm:$0x7]
        %v610 = vld [vmem:[#allocation2] sm:$0xf]
        %v611 = vld [vmem:[#allocation2 + $0x8] sm:$0x1]
        %v612 = vld [vmem:[#allocation2 + $0x4] sm:$0x8]
        %v613 = vld [vmem:[#allocation2 + $0xc] sm:$0xf]
        %v617 = vunpack.c.l.b16 %v598
        %v618 = vunpack.c.l.b16 %v599
        %v619 = vunpack.c.l.b16 %v600
        %v620 = vpack.c.b16 %v618, %v617
        %v621 = vpack.c.b16 %v619, %v619
        %v623 = vunpack.c.l.b16 %v601
        %v624 = vpack.c.b16 %v619, %v618
        %v625 = vpack.c.b16 %v623, %v623
        %v626 = vrot.slane %v624, 5
        %v627 = vrot.slane %v625, 5
        %v628 = vsel %vm487, %v626, %v627
        %629 = vrot.lane.b32.xlu0 %v626, 32
        %v630 = vpop.permute.xlu0 %629
        %631 = vrot.lane.b32.xlu0 %v628, 32
        %v632 = vpop.permute.xlu0 %631
        %v635 = vunpack.c.l.b16 %v602
        %v636 = vunpack.c.l.b16 %v603
        %v637 = vpack.c.b16 %v618, %v635
        %v638 = vpack.c.b16 %v636, %v636
        %vm639 = vcmask 1040384
        %v640 = vrot.slane %v637, 7
        %v641 = vrot.slane %v638, 7
        %v642 = vsel %vm639, %v640, %v641
        %643 = vrot.lane.b32.xlu0 %v640, 64
        %v644 = vpop.permute.xlu0 %643
        %645 = vrot.lane.b32.xlu0 %v642, 64
        %v646 = vpop.permute.xlu0 %645
        %v649 = vunpack.c.l.b16 %v604
        %v650 = vunpack.c.l.b16 %v605
        %v651 = vpack.c.b16 %v619, %v649
        %v652 = vpack.c.b16 %v650, %v650
        %vm653 = vcmask 1041408
        %v654 = vrot.slane %v651, 6
        %v655 = vrot.slane %v652, 6
        %v656 = vsel %vm653, %v654, %v655
        %657 = vrot.lane.b32.xlu0 %v654, 96
        %v658 = vpop.permute.xlu0 %657
        %659 = vrot.lane.b32.xlu0 %v656, 96
        %v660 = vpop.permute.xlu0 %659
        %v663 = vunpack.c.l.b16 %v606
        %v664 = vunpack.c.l.b16 %v607
        %v665 = vpack.c.b16 %v618, %v663
        %v666 = vpack.c.b16 %v664, %v664
        %v667 = vrot.slane %v665, 6
        %v668 = vrot.slane %v666, 6
        %v669 = vsel %vm653, %v667, %v668
        %v672 = vunpack.c.l.b16 %v608
        %v673 = vunpack.c.l.b16 %v609
        %v674 = vpack.c.b16 %v619, %v672
        %v675 = vpack.c.b16 %v673, %v673
        %v676 = vrot.slane %v674, 7
        %v677 = vrot.slane %v675, 7
        %v678 = vsel %vm639, %v676, %v677
        %679 = vrot.lane.b32.xlu0 %v676, 32
        %v680 = vpop.permute.xlu0 %679
        %681 = vrot.lane.b32.xlu0 %v678, 32
        %v682 = vpop.permute.xlu0 %681
        %v685 = vunpack.c.l.b16 %v610
        %v686 = vunpack.c.l.b16 %v611
        %v687 = vpack.c.b16 %v618, %v685
        %v688 = vpack.c.b16 %v686, %v686
        %v689 = vrot.slane %v687, 5
        %v690 = vrot.slane %v688, 5
        %v691 = vsel %vm487, %v689, %v690
        %692 = vrot.lane.b32.xlu0 %v689, 64
        %v693 = vpop.permute.xlu0 %692
        %694 = vrot.lane.b32.xlu0 %v691, 64
        %v695 = vpop.permute.xlu0 %694
        %v698 = vunpack.c.l.b16 %v612
        %v699 = vunpack.c.l.b16 %v613
        %v700 = vpack.c.b16 %v619, %v698
        %v701 = vpack.c.b16 %v699, %v699
        %702 = vrot.lane.b32.xlu0 %v700, 96
        %v703 = vpop.permute.xlu0 %702
        %704 = vrot.lane.b32.xlu0 %v701, 96
        %v705 = vpop.permute.xlu0 %704
        %v708 = vsel %vm495, %v620, %v630
        %v711 = vsel %vm495, %v621, %v632
        %v713 = vsel %vm501, %v708, %v644
        %v715 = vsel %vm501, %v711, %v646
        %v717 = vsel %vm574, %v713, %v658
        %v719 = vsel %vm574, %v715, %v660
        %v722 = vsel %vm495, %v667, %v680
        %v725 = vsel %vm495, %v669, %v682
        %v727 = vsel %vm501, %v722, %v693
        %v729 = vsel %vm501, %v725, %v695
        %v731 = vsel %vm574, %v727, %v703
        %v733 = vsel %vm574, %v729, %v705
        %v734 = vld [vmem:[%s5] sm:$0xf]
        %v735 = vld [vmem:[%s5 + $0x4] sm:$0xf]
        %v736 = vld [vmem:[%s5 + $0x8] sm:$0xf]
        %v737 = vld [vmem:[%s5 + $0xc] sm:$0xf]
        %v738 = vld [vmem:[%s6] sm:$0xf]
        %v739 = vld [vmem:[%s6 + $0x4] sm:$0xf]
        %v740 = vld [vmem:[%s6 + $0x8] sm:$0xf]
        %v741 = vld [vmem:[%s6 + $0xc] sm:$0xf]
        %v742 = vld [vmem:[%s6 + $0x10] sm:$0xf]
        %v743 = vld [vmem:[%s6 + $0x14] sm:$0xf]
        %v744 = vld [vmem:[%s6 + $0x18] sm:$0xf]
        %v745 = vld [vmem:[%s6 + $0x1c] sm:$0xf]
        %v746 = vld [vmem:[%s6 + $0x20] sm:$0xf]
        %v747 = vld [vmem:[%s6 + $0x24] sm:$0xf]
        %v748 = vld [vmem:[%s6 + $0x28] sm:$0xf]
        %v749 = vld [vmem:[%s6 + $0x2c] sm:$0xf]
        %v750 = vld [vmem:[%s6 + $0x30] sm:$0xf]
        %v751 = vld [vmem:[%s6 + $0x34] sm:$0xf]
        %v752 = vld [vmem:[%s6 + $0x38] sm:$0xf]
        %v753 = vld [vmem:[%s6 + $0x3c] sm:$0xf]
        %v754 = vld [vmem:[%s6 + $0x40] sm:$0xf]
        %v755 = vld [vmem:[%s6 + $0x44] sm:$0xf]
        %v756 = vld [vmem:[%s6 + $0x48] sm:$0xf]
        %v757 = vld [vmem:[%s6 + $0x4c] sm:$0xf]
        %v758 = vld [vmem:[%s6 + $0x50] sm:$0xf]
        %v759 = vld [vmem:[%s6 + $0x54] sm:$0xf]
        %v760 = vld [vmem:[%s6 + $0x58] sm:$0xf]
        %v761 = vld [vmem:[%s6 + $0x5c] sm:$0xf]
        %v762 = vld [vmem:[%s6 + $0x60] sm:$0xf]
        %v763 = vld [vmem:[%s6 + $0x64] sm:$0xf]
        %v764 = vld [vmem:[%s6 + $0x68] sm:$0xf]
        %v765 = vld [vmem:[%s6 + $0x6c] sm:$0xf]
        %v766 = vld [vmem:[%s6 + $0x70] sm:$0xf]
        %v767 = vld [vmem:[%s6 + $0x74] sm:$0xf]
        %v768 = vld [vmem:[%s6 + $0x78] sm:$0xf]
        %v769 = vld [vmem:[%s6 + $0x7c] sm:$0xf]
        %v770 = vshrl.u32 %v717, 16
        %v772 = vrot.slane %v770, 3
        %v773 = vshll.u32 %v717, 16
        %v775 = vrot.slane %v773, 4
        %v776 = vor.u32 %v772, %v775
        %v777 = vshrl.u32 %v719, 16
        %v779 = vrot.slane %v777, 3
        %v780 = vshll.u32 %v719, 16
        %v782 = vrot.slane %v780, 4
        %v783 = vor.u32 %v779, %v782
        %v784 = vsel %vm522, %v776, %v783
        %v785 = vshrl.u32 %v731, 16
        %v787 = vrot.slane %v785, 3
        %v788 = vshll.u32 %v731, 16
        %v790 = vrot.slane %v788, 4
        %v791 = vor.u32 %v787, %v790
        %v792 = vshrl.u32 %v733, 16
        %v794 = vrot.slane %v792, 3
        %v795 = vshll.u32 %v733, 16
        %v797 = vrot.slane %v795, 4
        %v798 = vor.u32 %v794, %v797
        %v799 = vsel %vm522, %v791, %v798
        %v834 = vunpack.c.l.b16 %v738
        %v835 = vunpack.c.l.b16 %v739
        %v836 = vunpack.c.l.b16 %v740
        %v837 = vunpack.c.l.b16 %v741
        %v838 = vunpack.c.l.b16 %v742
        %v839 = vunpack.c.l.b16 %v743
        %v840 = vunpack.c.l.b16 %v744
        %v841 = vunpack.c.l.b16 %v745
        %v842 = vunpack.c.l.b16 %v746
        %v843 = vunpack.c.l.b16 %v747
        %v844 = vunpack.c.l.b16 %v748
        %v845 = vunpack.c.l.b16 %v749
        %v846 = vunpack.c.l.b16 %v750
        %v847 = vunpack.c.l.b16 %v751
        %v848 = vunpack.c.l.b16 %v752
        %v849 = vunpack.c.l.b16 %v753
        %v850 = vunpack.c.l.b16 %v754
        %v851 = vunpack.c.l.b16 %v755
        %v852 = vunpack.c.l.b16 %v756
        %v853 = vunpack.c.l.b16 %v757
        %v854 = vunpack.c.l.b16 %v758
        %v855 = vunpack.c.l.b16 %v759
        %v856 = vunpack.c.l.b16 %v760
        %v857 = vunpack.c.l.b16 %v761
        %v858 = vunpack.c.l.b16 %v762
        %v859 = vunpack.c.l.b16 %v763
        %v860 = vunpack.c.l.b16 %v764
        %v861 = vunpack.c.l.b16 %v765
        %v862 = vunpack.c.l.b16 %v766
        %v863 = vunpack.c.l.b16 %v767
        %v864 = vunpack.c.l.b16 %v768
        %v865 = vunpack.c.l.b16 %v769
        %v866 = vpack.c.b16 %v835, %v834
        %v867 = vpack.c.b16 %v837, %v836
        %v868 = vpack.c.b16 %v839, %v838
        %v869 = vpack.c.b16 %v841, %v840
        %v870 = vpack.c.b16 %v843, %v842
        %v871 = vpack.c.b16 %v845, %v844
        %v872 = vpack.c.b16 %v847, %v846
        %v873 = vpack.c.b16 %v849, %v848
        %v874 = vpack.c.b16 %v851, %v850
        %v875 = vpack.c.b16 %v853, %v852
        %v876 = vpack.c.b16 %v855, %v854
        %v877 = vpack.c.b16 %v857, %v856
        %v878 = vpack.c.b16 %v859, %v858
        %v879 = vpack.c.b16 %v861, %v860
        %v880 = vpack.c.b16 %v863, %v862
        %v881 = vpack.c.b16 %v865, %v864
        %898 = vmatpush.bf16.msra.mxu0 %v873
        %899 = vmatpush.bf16.msra.mxu0 %v872
        %900 = vmatpush.bf16.msra.mxu0 %v871
        %901 = vmatpush.bf16.msra.mxu0 %v870
        %902 = vmatpush.bf16.msra.mxu0 %v869
        %903 = vmatpush.bf16.msra.mxu0 %v868
        %904 = vmatpush.bf16.msra.mxu0 %v867
        %905 = vmatpush.bf16.msra.mxu0 %v866
        %906 = vmatmul.bf16.gmra.mxu0 %v784
        %v907 = vpop.f32.mrf.mxu0
        %v908 = vadd.f32 0.0, %v907
        %v909 = vpop.f32.mrf.mxu0
        %v910 = vadd.f32 0.0, %v909
        %911 = vdwg.mxu0
        %912 = vmatpush.bf16.msra.mxu0 %v881
        %913 = vmatpush.bf16.msra.mxu0 %v880
        %914 = vmatpush.bf16.msra.mxu0 %v879
        %915 = vmatpush.bf16.msra.mxu0 %v878
        %916 = vmatpush.bf16.msra.mxu0 %v877
        %917 = vmatpush.bf16.msra.mxu0 %v876
        %918 = vmatpush.bf16.msra.mxu0 %v875
        %919 = vmatpush.bf16.msra.mxu0 %v874
        %920 = vmatmul.bf16.gmra.mxu0 %v799
        %v921 = vpop.f32.mrf.mxu0
        %v922 = vadd.f32 %v908, %v921
        %v923 = vpop.f32.mrf.mxu0
        %v924 = vadd.f32 %v910, %v923
        %925 = vdwg.mxu0
        %v928 = vunpack.c.l.b16 %v594
        %v929 = vunpack.c.l.b16 %v595
        %v930 = vpack.c.b16 %v929, %v928
        %v935 = vunpack.c.l.b16 %v734
        %v936 = vunpack.c.l.b16 %v735
        %v937 = vunpack.c.l.b16 %v736
        %v938 = vunpack.c.l.b16 %v737
        %v939 = vpack.c.b16 %v936, %v935
        %v940 = vpack.c.b16 %v938, %v937
        %v944 = vsel %vm495, %v930, 0
        %946 = vmatpush.bf16.msra.mxu0 0
        %947 = vmatpush.bf16.msra.mxu0 0
        %948 = vmatpush.bf16.msra.mxu0 0
        %949 = vmatpush.bf16.msra.mxu0 0
        %950 = vmatpush.bf16.msra.mxu0 0
        %951 = vmatpush.bf16.msra.mxu0 0
        %952 = vmatpush.bf16.msra.mxu0 %v940
        %953 = vmatpush.bf16.msra.mxu0 %v939
        %954 = vmatmul.bf16.gmra.mxu0 %v944
        %v955 = vpop.f32.mrf.mxu0
        %v956 = vadd.f32 %v922, %v955
        %v957 = vpop.f32.mrf.mxu0
        %v958 = vadd.f32 %v924, %v957
        %959 = vdwg.mxu0
        %v960 = vld [vmem:[%s7] sm:$0x1]
        %v962 = vperm.slane %v960, 0
        %v964 = vadd.f32 %v956, %v962
        %v965 = vadd.f32 %v958, %v962
        %v966 = vsel %vm495, %v964, 0.0
        %v967 = vsel %vm495, %v965, 0.0
        %v968 = vadd.f32 %v966, %v967
        %v969 = vrot.slane %v968, 4
        %v970 = vadd.f32 %v968, %v969
        %v971 = vrot.slane %v970, 2
        %v972 = vadd.f32 %v970, %v971
        %v973 = vrot.slane %v972, 1
        %v974 = vadd.f32 %v972, %v973
        %v975 = vrcp.pop 16.0
        %v976 = vmul.f32 16.0, %v975
        %v977 = vsub.f32 1.0, %v976
        %v978 = vmul.f32 %v975, %v977
        %v979 = vadd.f32 %v975, %v978
        %vm980 = vweird.f32 %v975
        %v981 = vsel %vm980, %v975, %v979
        %v982 = vmul.f32 %v974, %v981
        %v983 = vld [vmem:[%s8] sm:$0xff]
        %v984 = vld [vmem:[%s8 + $0x8] sm:$0xff]
        %v985 = vld [vmem:[%s8 + $0x10] sm:$0xff]
        %v986 = vld [vmem:[%s8 + $0x18] sm:$0xff]
        %v987 = vld [vmem:[%s9] sm:$0x1]
        %v989 = vsel %vm495, %v982, 0
        %991 = vmatpush.msra.mxu0 0.0
        %992 = vmatpush.msra.mxu0 0.0
        %993 = vmatpush.msra.mxu0 0.0
        %994 = vmatpush.msra.mxu0 0.0
        %995 = vmatpush.msra.mxu0 0.0
        %996 = vmatpush.msra.mxu0 0.0
        %997 = vmatpush.msra.mxu0 0.0
        %998 = vmatpush.msra.mxu0 0.0
        %999 = vmatpush.msra.mxu0 0.0
        %1000 = vmatpush.msra.mxu0 0.0
        %1001 = vmatpush.msra.mxu0 0.0
        %1002 = vmatpush.msra.mxu0 0.0
        %1003 = vmatpush.msra.mxu0 %v986
        %1004 = vmatpush.msra.mxu0 %v985
        %1005 = vmatpush.msra.mxu0 %v984
        %1006 = vmatpush.msra.mxu0 %v983
        %1007 = vmatmul.f32.gmra.mxu0 %v989
        %v1008 = vpop.f32.mrf.mxu0
        %v1009 = vadd.f32 %v987, %v1008
        %1010 = vdwg.mxu0
        %v1011 = vmax.f32 %v1009, 0.0
        %v1012 = vld [vmem:[%s10] sm:$0xff]
        %v1013 = vld [vmem:[%s11] sm:$0x1]
        %vm1014 = vcmask 64512
        %v1016 = vsel %vm1014, %v1011, 0
        %1018 = vmatpush.msra.mxu0 0.0
        %1019 = vmatpush.msra.mxu0 0.0
        %1020 = vmatpush.msra.mxu0 0.0
        %1021 = vmatpush.msra.mxu0 0.0
        %1022 = vmatpush.msra.mxu0 0.0
        %1023 = vmatpush.msra.mxu0 0.0
        %1024 = vmatpush.msra.mxu0 0.0
        %1025 = vmatpush.msra.mxu0 0.0
        %1026 = vmatpush.msra.mxu0 0.0
        %1027 = vmatpush.msra.mxu0 0.0
        %1028 = vmatpush.msra.mxu0 0.0
        %1029 = vmatpush.msra.mxu0 0.0
        %1030 = vmatpush.msra.mxu0 0.0
        %1031 = vmatpush.msra.mxu0 0.0
        %1032 = vmatpush.msra.mxu0 0.0
        %1033 = vmatpush.msra.mxu0 %v1012
        %1034 = vmatmul.f32.gmra.mxu0 %v1016
        %v1035 = vpop.f32.mrf.mxu0
        %v1036 = vadd.f32 %v1013, %v1035
        %1037 = vdwg.mxu0
        %v1038 = vsub.f32 0.0, %v1036
        %v1039 = vmul.f32 %v1038, 1.442695
        %v1040 = vpow.pop %v1039
        %v1041 = vadd.f32 %v1040, 1.0
        %v1042 = vrcp.pop %v1041
        %v1043 = vmul.f32 %v1041, %v1042
        %v1044 = vsub.f32 1.0, %v1043
        %v1045 = vmul.f32 %v1042, %v1044
        %v1046 = vadd.f32 %v1042, %v1045
        %vm1047 = vweird.f32 %v1041
        %vm1048 = vweird.f32 %v1042
        %vm1049 = vmor %vm1047, %vm1048
        %v1050 = vsel %vm1049, %v1042, %v1046
        %v1051 = vand.u32 2147483647, %v1041
        %vm1052 = vcmp.eq.f32.partialorder %v1051, 8.507059e+37
        %v1053 = vand.u32 %v1041, 2147483648
        %v1054 = vor.u32 1.1754944e-38, %v1053
        %v1055 = vsel %vm1052, %v1054, %v1050
        %v1056 = vmul.f32 1.0, %v1055
        %v1057 = vperm.slane %v1056, 0
        %v1058 = vmul.f32 %v1057, %v964
        %v1059 = vmul.f32 %v1057, %v965
        %v1060 = vunpack.c.l.bf16 %v452
        %v1061 = vunpack.c.l.bf16 %v453
        %v1062 = vadd.f32 %v1058, %v1060
        %v1063 = vadd.f32 %v1059, %v1061
        %v1064 = vmax.f32 %v1062, 0.0
        %v1065 = vmax.f32 %v1063, 0.0
        %v1068 = vrot.slane %v1064, 2
        %v1069 = vrot.slane %v1064, 4
        %v1070 = vrot.slane %v1064, 6
        %v1071 = vrot.slane %v1065, 2
        %v1072 = vrot.slane %v1065, 4
        %v1073 = vrot.slane %v1065, 6
        %vm1080 = vcmask 254976
        %v1081 = vsel %vm1080, %v1064, -inf
        %v1082 = vrot.slane %v1081, 4
        %v1083 = vmax.f32 %v1081, %v1082
        %v1084 = vrot.slane %v1083, 2
        %v1085 = vmax.f32 %v1083, %v1084
        %v1086 = vrot.slane %v1085, 1
        %v1087 = vmax.f32 %v1085, %v1086
        %v1088 = vsel %vm1080, %v1068, -inf
        %v1089 = vrot.slane %v1088, 4
        %v1090 = vmax.f32 %v1088, %v1089
        %v1091 = vrot.slane %v1090, 2
        %v1092 = vmax.f32 %v1090, %v1091
        %v1093 = vrot.slane %v1092, 1
        %v1094 = vmax.f32 %v1092, %v1093
        %v1095 = vsel %vm1080, %v1069, -inf
        %v1096 = vrot.slane %v1095, 4
        %v1097 = vmax.f32 %v1095, %v1096
        %v1098 = vrot.slane %v1097, 2
        %v1099 = vmax.f32 %v1097, %v1098
        %v1100 = vrot.slane %v1099, 1
        %v1101 = vmax.f32 %v1099, %v1100
        %v1102 = vsel %vm1080, %v1070, -inf
        %v1103 = vrot.slane %v1102, 4
        %v1104 = vmax.f32 %v1102, %v1103
        %v1105 = vrot.slane %v1104, 2
        %v1106 = vmax.f32 %v1104, %v1105
        %v1107 = vrot.slane %v1106, 1
        %v1108 = vmax.f32 %v1106, %v1107
        %v1109 = vsel %vm1080, %v1065, -inf
        %v1110 = vrot.slane %v1109, 4
        %v1111 = vmax.f32 %v1109, %v1110
        %v1112 = vrot.slane %v1111, 2
        %v1113 = vmax.f32 %v1111, %v1112
        %v1114 = vrot.slane %v1113, 1
        %v1115 = vmax.f32 %v1113, %v1114
        %v1116 = vsel %vm1080, %v1071, -inf
        %v1117 = vrot.slane %v1116, 4
        %v1118 = vmax.f32 %v1116, %v1117
        %v1119 = vrot.slane %v1118, 2
        %v1120 = vmax.f32 %v1118, %v1119
        %v1121 = vrot.slane %v1120, 1
        %v1122 = vmax.f32 %v1120, %v1121
        %v1123 = vsel %vm1080, %v1072, -inf
        %v1124 = vrot.slane %v1123, 4
        %v1125 = vmax.f32 %v1123, %v1124
        %v1126 = vrot.slane %v1125, 2
        %v1127 = vmax.f32 %v1125, %v1126
        %v1128 = vrot.slane %v1127, 1
        %v1129 = vmax.f32 %v1127, %v1128
        %v1130 = vsel %vm1080, %v1073, -inf
        %v1131 = vrot.slane %v1130, 4
        %v1132 = vmax.f32 %v1130, %v1131
        %v1133 = vrot.slane %v1132, 2
        %v1134 = vmax.f32 %v1132, %v1133
        %v1135 = vrot.slane %v1134, 1
        %v1136 = vmax.f32 %v1134, %v1135
        %vm1145 = vcmask 1041409
        %v1146 = vsel %vm1145, %v1094, %v1087
        %vm1147 = vcmask 1042434
        %v1148 = vsel %vm1147, %v1101, %v1146
        %vm1149 = vcmask 1043459
        %v1150 = vsel %vm1149, %v1108, %v1148
        %vm1151 = vcmask 1044484
        %v1152 = vsel %vm1151, %v1115, %v1150
        %vm1153 = vcmask 1045509
        %v1154 = vsel %vm1153, %v1122, %v1152
        %vm1155 = vcmask 1046534
        %v1156 = vsel %vm1155, %v1129, %v1154
        %vm1157 = vcmask 1047559
        %v1158 = vsel %vm1157, %v1136, %v1156
        %1160 = vst.msk [vmem:[%s407] sm:$0xff] %vm495, %v1158
        %s1161 = sand.u32 %s291, 1
        %s1162 = scalar_lea.sflag [#allocation4], %s1161
        %s1163 = sand.u32 %s291, 1
        %s1164 = smul.addr %s1163, 8
        %s1165 = scalar_lea.vmem [#allocation3], %s1164
        // Predicated region
        $region69: #{tpu_custom_call.1} parent=67 // pred_check
          %p1166 = pneg %p301
        $region70: #{tpu_custom_call.1} parent=67 // pred_check_branch
          %1168 = sbr.rel (%p1166) target = $region72
        $region71: #{tpu_custom_call.1} parent=67 // pred_region
          %1170 = vsyncadd %s1162, 0
          %s1171 = smul.addr %s26, 8
          %s1172 = scalar_lea.hbm %s12, %s1171
          %s1174 = sshll.u32 %s1165, 4
          %s1175 = int_to_ptr.vmem [resolvable:$true] %s1174
          %s1176 = sshll.u32 %s1172, 4
          %s1177 = int_to_ptr.hbm [resolvable:$true] %s1176
          %1179 = dma.vmem_to_hbm [thread:$0]  %s1175, 128, %s1177, %s1162
        $region72: #{tpu_custom_call.1} parent=67 // pred_fallthru
          _
      $region68: #{tpu_custom_call.1} parent=5 // pred_fallthru
        _
      %p1180 = scmp.le.s32.totalorder 2, %s21
      // Predicated region
      $region73: #{tpu_custom_call.1} parent=5 // pred_check
        %p1181 = pneg %p1180
      $region74: #{tpu_custom_call.1} parent=5 // pred_check_branch
        %1183 = sbr.rel (%p1181) target = $region76
      $region75: #{tpu_custom_call.1} parent=5 // pred_region
        %s1184 = ssub.s32 %s21, 2
        // Predicated region
        $region77: #{tpu_custom_call.1} parent=75 // pred_check
          %p1185 = pneg %p307
        $region78: #{tpu_custom_call.1} parent=75 // pred_check_branch
          %1187 = sbr.rel (%p1185) target = $region80
        $region79: #{tpu_custom_call.1} parent=75 // pred_region
          %s1188 = sand.u32 %s292, 1
          %s1189 = scalar_lea.sflag [#allocation4], %s1188
          %s1190 = sand.u32 %s292, 1
          %s1191 = smul.addr %s1190, 8
          %s1192 = scalar_lea.vmem [#allocation3], %s1191
          %1194 = dma.done %s1189, 128
        $region80: #{tpu_custom_call.1} parent=75 // pred_fallthru
          _
      $region76: #{tpu_custom_call.1} parent=5 // pred_fallthru
        _
    $region6: #{tpu_custom_call.1} parent=1 // loop_footer
      %s25 = sadd.s32 1, %s21
    $region7: #{tpu_custom_call.1} parent=1 // loop_footer_branch
      %20 = sbr.rel target = $region3
    $region8: #{tpu_custom_call.1} parent=1 // loop_exit
      _
    %1195 = vsyncpa [#allocation4], 1
    %s1196 = scalar_lea.sflag [#allocation4], 1
    %1197 = vsyncpa %s1196, 1

</llo_original>
